<compile_context>
chip_gen: v7x
topology: tpu7x:2x2x1
jax: 0.10.0
libtpu: 0.0.40
codegen_flags: <defaults>
</compile_context>

<pallas_src>
import functools

import jax
import jax.numpy as jnp
from jax.experimental import pallas as pl
from jax.experimental.pallas import tpu as pltpu


# ------------------------------ small helpers --------------------------------

def _pick_tile(total, target):
    """Largest divisor of `total` that is <= target, preferring multiples of 8."""
    divs = [d for d in range(1, total + 1) if total % d == 0 and d <= target]
    if not divs:
        return total
    div8 = [d for d in divs if d % 8 == 0]
    return max(div8) if div8 else max(divs)


_VMEM_LIMIT = 32 * 1024 * 1024   # safe on v5e/v6e/v7x; plenty at these tile sizes


# --------------------- kernel 1: fused input projections ---------------------

def _proj_kernel(src_ref, pos_ref, wv_ref, bv_ref, wx_ref, bx_ref,
                 wy_ref, by_ref, wa_ref, ba_ref,
                 val_ref, offx_ref, offy_ref, logit_ref):
    s = src_ref[...]
    q = s + pos_ref[...]                                    # with_pos_embed, fused
    val_ref[...] = (jnp.dot(s, wv_ref[...],
                            preferred_element_type=jnp.float32) + bv_ref[...])
    offx_ref[...] = (jnp.dot(q, wx_ref[...],
                             preferred_element_type=jnp.float32) + bx_ref[...])
    offy_ref[...] = (jnp.dot(q, wy_ref[...],
                             preferred_element_type=jnp.float32) + by_ref[...])
    logit_ref[...] = (jnp.dot(q, wa_ref[...],
                              preferred_element_type=jnp.float32) + ba_ref[...])


def fused_projections(src2d, pos2d, p, tile_rows):
    R, D = src2d.shape
    MLP = p["attention_weights"][0].shape[1]
    tr = tile_rows
    row = lambda i: (i, 0)
    full = lambda i: (0, 0)
    return pl.pallas_call(
        _proj_kernel,
        out_shape=(jax.ShapeDtypeStruct((R, D), jnp.float32),
                   jax.ShapeDtypeStruct((R, MLP), jnp.float32),
                   jax.ShapeDtypeStruct((R, MLP), jnp.float32),
                   jax.ShapeDtypeStruct((R, MLP), jnp.float32)),
        grid=(R // tr,),
        in_specs=[pl.BlockSpec((tr, D), row), pl.BlockSpec((tr, D), row),
                  pl.BlockSpec(p["value_proj"][0].shape, full),
                  pl.BlockSpec(p["value_proj"][1].shape, full),
                  pl.BlockSpec(p["sampling_offsets_x"][0].shape, full),
                  pl.BlockSpec(p["sampling_offsets_x"][1].shape, full),
                  pl.BlockSpec(p["sampling_offsets_y"][0].shape, full),
                  pl.BlockSpec(p["sampling_offsets_y"][1].shape, full),
                  pl.BlockSpec(p["attention_weights"][0].shape, full),
                  pl.BlockSpec(p["attention_weights"][1].shape, full)],
        out_specs=(pl.BlockSpec((tr, D), row),
                   pl.BlockSpec((tr, MLP), row),
                   pl.BlockSpec((tr, MLP), row),
                   pl.BlockSpec((tr, MLP), row)),
        compiler_params=pltpu.CompilerParams(
            dimension_semantics=("parallel",),
            vmem_limit_bytes=_VMEM_LIMIT),
    )(src2d, pos2d, *p["value_proj"], *p["sampling_offsets_x"],
      *p["sampling_offsets_y"], *p["attention_weights"])


# ------------------- kernel 2: deformable attention core ---------------------

def _deform_kernel(val_ref, offx_ref, offy_ref, logit_ref, refx_ref, refy_ref,
                   o_ref, *, spatial_shapes, starts, M, L, P, Dh):
    tq = offx_ref.shape[1]
    value = val_ref[0]            # (S, D)  -- head split via static lane slices
    offx = offx_ref[0]            # (tq, M*L*P), column layout [m][l][p]
    offy = offy_ref[0]
    logits = logit_ref[0]         # (tq, M*L*P)
    refx = refx_ref[0]            # (tq, L)
    refy = refy_ref[0]
    LP = L * P

    out_heads = []
    for h in range(M):
        # softmax over the (levels*points) axis, matching F.softmax(attn, -1)
        lg = logits[:, h * LP:(h + 1) * LP]
        mx = jnp.max(lg, axis=-1, keepdims=True)
        e = jnp.exp(lg - mx)
        attn = e * pl.reciprocal(jnp.sum(e, axis=-1, keepdims=True), approx=True)

        out_h = jnp.zeros((tq, Dh), jnp.float32)
        for l, (H, W) in enumerate(spatial_shapes):
            Sl = H * W
            start = starts[l]
            base = (h * L + l) * P
            # grid_sample(align_corners=False, padding='zeros'):
            #   pixel = loc * size - 0.5,   loc = ref + off / (W, H)
            #   =>  pixel = ref * size + off - 0.5
            x = refx[:, l:l + 1] * W + offx[:, base:base + P] - 0.5   # (tq, P)
            y = refy[:, l:l + 1] * H + offy[:, base:base + P] - 0.5
            aw = attn[:, l * P:(l + 1) * P]                            # (tq, P)
            x0 = jnp.floor(x)
            y0 = jnp.floor(y)
            fx = x - x0
            fy = y - y0
            x0i = x0.astype(jnp.int32)
            y0i = y0.astype(jnp.int32)

            # stack the 4 bilinear corners along the point axis -> (tq, 4P)
            idx_parts, wgt_parts = [], []
            for dx, dy in ((0, 0), (1, 0), (0, 1), (1, 1)):
                cx = x0i + dx
                cy = y0i + dy
                wx = fx if dx else 1.0 - fx
                wy = fy if dy else 1.0 - fy
                valid = (cx >= 0) & (cx < W) & (cy >= 0) & (cy < H)
                idx_parts.append(jnp.where(valid, cy * W + cx, -1))
                wgt_parts.append(jnp.where(valid, wx * wy, 0.0) * aw)
            idx = jnp.concatenate(idx_parts, axis=-1)     # (tq, 4P), local index
            wgt = jnp.concatenate(wgt_parts, axis=-1)     # (tq, 4P)

            # one-hot restricted to THIS level's spatial extent S_l
            iota = jax.lax.broadcasted_iota(jnp.int32, (tq, 4 * P, Sl), 2)
            onehot = (idx[:, :, None] == iota).astype(jnp.float32)
            acc = jnp.sum(wgt[:, :, None] * onehot, axis=1)            # (tq, Sl)

            v_l = value[start:start + Sl, h * Dh:(h + 1) * Dh]          # (Sl, Dh)
            out_h = out_h + jnp.dot(acc, v_l,
                                    preferred_element_type=jnp.float32)
        out_heads.append(out_h)

    # single lane-dense (tq, M*Dh) = (tq, d_model) output store
    o_ref[0] = jnp.concatenate(out_heads, axis=-1)


def deform_attn_core(value, offx, offy, logits, refx, refy,
                     spatial_shapes, starts, M, P, tile_q):
    N, S, D = value.shape
    _, Lq, MLP = offx.shape
    L = len(spatial_shapes)
    Dh = D // M
    tq = tile_q
    kernel = functools.partial(_deform_kernel,
                               spatial_shapes=tuple(spatial_shapes),
                               starts=tuple(starts), M=M, L=L, P=P, Dh=Dh)
    qmap = lambda n, t: (n, t, 0)
    mm_flops = 2 * N * Lq * M * S * Dh
    onehot_ops = 3 * N * Lq * M * 4 * P * S
    cost = pl.CostEstimate(
        flops=int(mm_flops + onehot_ops),
        transcendentals=int(N * Lq * M * L * P),
        bytes_accessed=int(4 * (value.size + offx.size + offy.size + logits.size
                                + refx.size + refy.size + N * Lq * D)))
    return pl.pallas_call(
        kernel,
        out_shape=jax.ShapeDtypeStruct((N, Lq, D), jnp.float32),
        grid=(N, Lq // tq),
        in_specs=[
            pl.BlockSpec((1, S, D), lambda n, t: (n, 0, 0)),   # value: no transpose
            pl.BlockSpec((1, tq, MLP), qmap),
            pl.BlockSpec((1, tq, MLP), qmap),
            pl.BlockSpec((1, tq, MLP), qmap),
            pl.BlockSpec((1, tq, L), qmap),
            pl.BlockSpec((1, tq, L), qmap),
        ],
        out_specs=pl.BlockSpec((1, tq, D), qmap),
        compiler_params=pltpu.CompilerParams(
            dimension_semantics=("parallel", "parallel"),
            vmem_limit_bytes=_VMEM_LIMIT),
        cost_estimate=cost,
    )(value, offx, offy, logits, refx, refy)


# --------------- kernel 3: output_proj + residual + LayerNorm1 ---------------

def _out_ln_kernel(samp_ref, res_ref, w_ref, b_ref, g_ref, beta_ref, o_ref):
    src2 = (jnp.dot(samp_ref[...], w_ref[...],
                    preferred_element_type=jnp.float32) + b_ref[...])
    y = res_ref[...] + src2                       # dropout1 is identity (eval)
    mean = jnp.mean(y, axis=-1, keepdims=True)
    var = jnp.mean((y - mean) ** 2, axis=-1, keepdims=True)
    o_ref[...] = (y - mean) * jax.lax.rsqrt(var + 1e-5) * g_ref[...] + beta_ref[...]


def out_proj_ln(sampled2d, src2d, p, tile_rows):
    R, D = sampled2d.shape
    tr = tile_rows
    row = lambda i: (i, 0)
    full = lambda i: (0, 0)
    return pl.pallas_call(
        _out_ln_kernel,
        out_shape=jax.ShapeDtypeStruct((R, D), jnp.float32),
        grid=(R // tr,),
        in_specs=[pl.BlockSpec((tr, D), row), pl.BlockSpec((tr, D), row),
                  pl.BlockSpec(p["output_proj"][0].shape, full),
                  pl.BlockSpec(p["output_proj"][1].shape, full),
                  pl.BlockSpec(p["norm1"][0].shape, full),
                  pl.BlockSpec(p["norm1"][1].shape, full)],
        out_specs=pl.BlockSpec((tr, D), row),
        compiler_params=pltpu.CompilerParams(
            dimension_semantics=("parallel",),
            vmem_limit_bytes=_VMEM_LIMIT),
    )(sampled2d, src2d, *p["output_proj"], *p["norm1"])


# ------------------ kernel 4: FFN + residual + LayerNorm2 --------------------

def _ffn_ln_kernel(x_ref, w1_ref, b1_ref, w2_ref, b2_ref, g_ref, beta_ref, o_ref):
    x = x_ref[...]
    h = jnp.dot(x, w1_ref[...], preferred_element_type=jnp.float32) + b1_ref[...]
    h = jnp.maximum(h, 0.0)                       # activation='relu'; dropout2 id
    y = x + (jnp.dot(h, w2_ref[...], preferred_element_type=jnp.float32)
             + b2_ref[...])                       # dropout3 identity (eval)
    mean = jnp.mean(y, axis=-1, keepdims=True)
    var = jnp.mean((y - mean) ** 2, axis=-1, keepdims=True)
    o_ref[...] = (y - mean) * jax.lax.rsqrt(var + 1e-5) * g_ref[...] + beta_ref[...]


def ffn_ln(x2d, p, tile_rows):
    R, D = x2d.shape
    F = p["linear1"][0].shape[1]
    tr = tile_rows
    row = lambda i: (i, 0)
    full = lambda i: (0, 0)
    cost = pl.CostEstimate(
        flops=int(4 * R * D * F),
        transcendentals=0,
        bytes_accessed=int(4 * (2 * R * D + 2 * D * F + D + F)))
    return pl.pallas_call(
        _ffn_ln_kernel,
        out_shape=jax.ShapeDtypeStruct((R, D), jnp.float32),
        grid=(R // tr,),
        in_specs=[pl.BlockSpec((tr, D), row),
                  pl.BlockSpec(p["linear1"][0].shape, full),
                  pl.BlockSpec(p["linear1"][1].shape, full),
                  pl.BlockSpec(p["linear2"][0].shape, full),
                  pl.BlockSpec(p["linear2"][1].shape, full),
                  pl.BlockSpec(p["norm2"][0].shape, full),
                  pl.BlockSpec(p["norm2"][1].shape, full)],
        out_specs=pl.BlockSpec((tr, D), row),
        compiler_params=pltpu.CompilerParams(
            dimension_semantics=("parallel",),
            vmem_limit_bytes=_VMEM_LIMIT),
        cost_estimate=cost,
    )(x2d, *p["linear1"], *p["linear2"], *p["norm2"])


# ------------------------------ parameters -----------------------------------

def init_params(key, d_model, d_ffn, n_levels, n_heads, n_points):
    keys = jax.random.split(key, 7)

    def lin(k, din, dout, scale=0.05):
        kw, kb = jax.random.split(k)
        return (scale * jax.random.normal(kw, (din, dout), jnp.float32),
                scale * jax.random.normal(kb, (1, dout), jnp.float32))

    MLP = n_heads * n_levels * n_points
    # NOTE: the PyTorch sampling_offsets Linear has output dim M*L*P*2 with the
    # trailing (x, y) interleaved; here its columns are stored de-interleaved as
    # two weights (a pure column permutation of that Linear — identical math,
    # TPU-lane-friendlier layout).
    return {
        "value_proj": lin(keys[0], d_model, d_model),
        "sampling_offsets_x": lin(keys[1], d_model, MLP),
        "sampling_offsets_y": lin(keys[2], d_model, MLP),
        "attention_weights": lin(keys[3], d_model, MLP),
        "output_proj": lin(keys[4], d_model, d_model),
        "linear1": lin(keys[5], d_model, d_ffn),
        "linear2": lin(keys[6], d_ffn, d_model),
        "norm1": (jnp.ones((1, d_model), jnp.float32),
                  jnp.zeros((1, d_model), jnp.float32)),
        "norm2": (jnp.ones((1, d_model), jnp.float32),
                  jnp.zeros((1, d_model), jnp.float32)),
    }


# -------------------------------- forward ------------------------------------

def encoder_layer_forward(params, src, pos, reference_points, spatial_shapes,
                          n_heads, n_points, row_tile_target=128,
                          q_tile_target=64):
    # spatial_shapes: static list of (H, W); level_start_index derived from it.
    # row/q tile targets are sized for the toy demo; at production sizes pick
    # ~256-512 rows (bounded so tq * S_level * 4B stays well under VMEM on v7x).
    N, Lq, D = src.shape
    L = len(spatial_shapes)
    M, P = n_heads, n_points
    S = sum(h * w for h, w in spatial_shapes)
    assert Lq == S, "encoder: queries are the flattened multi-scale features"
    starts = [0]
    for h, w in spatial_shapes[:-1]:
        starts.append(starts[-1] + h * w)

    R = N * Lq
    tr = _pick_tile(R, row_tile_target)
    tq = _pick_tile(Lq, q_tile_target)

    src2d = src.reshape(R, D)
    pos2d = pos.reshape(R, D)

    # one fused launch: value / offset-x / offset-y / attention-logit projections
    value2d, offx2d, offy2d, logits2d = fused_projections(src2d, pos2d, params, tr)

    # free row-major reshapes only — no head-major transposes in HBM
    value = value2d.reshape(N, S, D)
    offx = offx2d.reshape(N, Lq, M * L * P)
    offy = offy2d.reshape(N, Lq, M * L * P)
    logits = logits2d.reshape(N, Lq, M * L * P)
    refx = reference_points[..., 0]          # (N, Lq, L) — tiny elementwise glue
    refy = reference_points[..., 1]

    sampled = deform_attn_core(value, offx, offy, logits, refx, refy,
                               spatial_shapes, starts, M, P, tq)  # (N, Lq, D)

    x = out_proj_ln(sampled.reshape(R, D), src2d, params, tr)     # +res, norm1
    x = ffn_ln(x, params, tr)                                     # FFN,+res, norm2
    return x.reshape(N, Lq, D)


# ---------------------------------- main --------------------------------------

if __name__ == "__main__":
    d_model, d_ffn = 32, 64
    n_levels, n_heads, n_points = 2, 4, 4
    spatial_shapes = [(8, 8), (4, 4)]              # static (H, W) per level
    N = 2
    Lq = sum(h * w for h, w in spatial_shapes)     # 80 encoder tokens

    key = jax.random.PRNGKey(0)
    kp, ks, kpos, kref = jax.random.split(key, 4)
    params = init_params(kp, d_model, d_ffn, n_levels, n_heads, n_points)
    src = jax.random.normal(ks, (N, Lq, d_model), jnp.float32)
    pos = jax.random.normal(kpos, (N, Lq, d_model), jnp.float32)
    reference_points = jax.random.uniform(kref, (N, Lq, n_levels, 2),
                                          jnp.float32)

    out = encoder_layer_forward(params, src, pos, reference_points,
                                spatial_shapes, n_heads, n_points)
    out = jax.block_until_ready(out)
    assert out.shape == (N, Lq, d_model)
    assert bool(jnp.all(jnp.isfinite(out)))
    print("KERNEL_OK")
</pallas_src>

<mosaic_0001>
module attributes {stable_mosaic.version = 11 : i64} {
  func.func @_proj_kernel(%arg0: i32, %arg1: memref<80x32xf32, #tpu.memory_space<vmem>>, %arg2: memref<80x32xf32, #tpu.memory_space<vmem>>, %arg3: memref<32x32xf32, #tpu.memory_space<vmem>>, %arg4: memref<1x32xf32, #tpu.memory_space<vmem>>, %arg5: memref<32x32xf32, #tpu.memory_space<vmem>>, %arg6: memref<1x32xf32, #tpu.memory_space<vmem>>, %arg7: memref<32x32xf32, #tpu.memory_space<vmem>>, %arg8: memref<1x32xf32, #tpu.memory_space<vmem>>, %arg9: memref<32x32xf32, #tpu.memory_space<vmem>>, %arg10: memref<1x32xf32, #tpu.memory_space<vmem>>, %arg11: memref<80x32xf32, #tpu.memory_space<vmem>>, %arg12: memref<80x32xf32, #tpu.memory_space<vmem>>, %arg13: memref<80x32xf32, #tpu.memory_space<vmem>>, %arg14: memref<80x32xf32, #tpu.memory_space<vmem>>) attributes {dimension_semantics = [#tpu.dimension_semantics<parallel>], iteration_bounds = array<i64: 2>, scalar_prefetch = 0 : i64, scratch_operands = 0 : i64, tpu.core_type = #tpu.core_type<tc>, window_params = [{transform_indices = @transform_0, window_bounds = array<i64: 80, 32>}, {transform_indices = @transform_1, window_bounds = array<i64: 80, 32>}, {pipeline_mode = #tpu.pipeline_mode<synchronous>, transform_indices = @transform_2, window_bounds = array<i64: 32, 32>}, {pipeline_mode = #tpu.pipeline_mode<synchronous>, transform_indices = @transform_3, window_bounds = array<i64: 1, 32>}, {pipeline_mode = #tpu.pipeline_mode<synchronous>, transform_indices = @transform_4, window_bounds = array<i64: 32, 32>}, {pipeline_mode = #tpu.pipeline_mode<synchronous>, transform_indices = @transform_5, window_bounds = array<i64: 1, 32>}, {pipeline_mode = #tpu.pipeline_mode<synchronous>, transform_indices = @transform_6, window_bounds = array<i64: 32, 32>}, {pipeline_mode = #tpu.pipeline_mode<synchronous>, transform_indices = @transform_7, window_bounds = array<i64: 1, 32>}, {pipeline_mode = #tpu.pipeline_mode<synchronous>, transform_indices = @transform_8, window_bounds = array<i64: 32, 32>}, {pipeline_mode = #tpu.pipeline_mode<synchronous>, transform_indices = @transform_9, window_bounds = array<i64: 1, 32>}, {transform_indices = @transform_10, window_bounds = array<i64: 80, 32>}, {transform_indices = @transform_11, window_bounds = array<i64: 80, 32>}, {transform_indices = @transform_12, window_bounds = array<i64: 80, 32>}, {transform_indices = @transform_13, window_bounds = array<i64: 80, 32>}]} {
    %c0 = arith.constant 0 : index
    %c0_0 = arith.constant 0 : index
    %0 = vector.load %arg1[%c0, %c0_0] : memref<80x32xf32, #tpu.memory_space<vmem>>, vector<80x32xf32>
    %c0_1 = arith.constant 0 : index
    %c0_2 = arith.constant 0 : index
    %1 = vector.load %arg2[%c0_1, %c0_2] : memref<80x32xf32, #tpu.memory_space<vmem>>, vector<80x32xf32>
    %2 = arith.addf %0, %1 : vector<80x32xf32>
    %c0_3 = arith.constant 0 : index
    %c0_4 = arith.constant 0 : index
    %3 = vector.load %arg3[%c0_3, %c0_4] : memref<32x32xf32, #tpu.memory_space<vmem>>, vector<32x32xf32>
    %cst = arith.constant dense<0.000000e+00> : vector<80x32xf32>
    %4 = tpu.matmul %0, %3, %cst {dimension_numbers = #tpu.dot_dimension_numbers<[1], [0], [0], [1], [0, 0, 1, 1], [], []>} : vector<80x32xf32>, vector<32x32xf32>, vector<80x32xf32> -> vector<80x32xf32>
    %c0_5 = arith.constant 0 : index
    %c0_6 = arith.constant 0 : index
    %5 = vector.load %arg4[%c0_5, %c0_6] : memref<1x32xf32, #tpu.memory_space<vmem>>, vector<1x32xf32>
    %6 = vector.broadcast %5 : vector<1x32xf32> to vector<80x32xf32>
    %7 = arith.addf %4, %6 : vector<80x32xf32>
    %c0_7 = arith.constant 0 : index
    %c0_8 = arith.constant 0 : index
    %8 = vector.load %arg11[%c0_7, %c0_8] : memref<80x32xf32, #tpu.memory_space<vmem>>, vector<80x32xf32>
    tpu.vector_store %arg11[%c0_7, %c0_8], %7 {strides = array<i32>} : memref<80x32xf32, #tpu.memory_space<vmem>>, vector<80x32xf32>,
    %c0_9 = arith.constant 0 : index
    %c0_10 = arith.constant 0 : index
    %9 = vector.load %arg5[%c0_9, %c0_10] : memref<32x32xf32, #tpu.memory_space<vmem>>, vector<32x32xf32>
    %cst_11 = arith.constant dense<0.000000e+00> : vector<80x32xf32>
    %10 = tpu.matmul %2, %9, %cst_11 {dimension_numbers = #tpu.dot_dimension_numbers<[1], [0], [0], [1], [0, 0, 1, 1], [], []>} : vector<80x32xf32>, vector<32x32xf32>, vector<80x32xf32> -> vector<80x32xf32>
    %c0_12 = arith.constant 0 : index
    %c0_13 = arith.constant 0 : index
    %11 = vector.load %arg6[%c0_12, %c0_13] : memref<1x32xf32, #tpu.memory_space<vmem>>, vector<1x32xf32>
    %12 = vector.broadcast %11 : vector<1x32xf32> to vector<80x32xf32>
    %13 = arith.addf %10, %12 : vector<80x32xf32>
    %c0_14 = arith.constant 0 : index
    %c0_15 = arith.constant 0 : index
    %14 = vector.load %arg12[%c0_14, %c0_15] : memref<80x32xf32, #tpu.memory_space<vmem>>, vector<80x32xf32>
    tpu.vector_store %arg12[%c0_14, %c0_15], %13 {strides = array<i32>} : memref<80x32xf32, #tpu.memory_space<vmem>>, vector<80x32xf32>,
    %c0_16 = arith.constant 0 : index
    %c0_17 = arith.constant 0 : index
    %15 = vector.load %arg7[%c0_16, %c0_17] : memref<32x32xf32, #tpu.memory_space<vmem>>, vector<32x32xf32>
    %cst_18 = arith.constant dense<0.000000e+00> : vector<80x32xf32>
    %16 = tpu.matmul %2, %15, %cst_18 {dimension_numbers = #tpu.dot_dimension_numbers<[1], [0], [0], [1], [0, 0, 1, 1], [], []>} : vector<80x32xf32>, vector<32x32xf32>, vector<80x32xf32> -> vector<80x32xf32>
    %c0_19 = arith.constant 0 : index
    %c0_20 = arith.constant 0 : index
    %17 = vector.load %arg8[%c0_19, %c0_20] : memref<1x32xf32, #tpu.memory_space<vmem>>, vector<1x32xf32>
    %18 = vector.broadcast %17 : vector<1x32xf32> to vector<80x32xf32>
    %19 = arith.addf %16, %18 : vector<80x32xf32>
    %c0_21 = arith.constant 0 : index
    %c0_22 = arith.constant 0 : index
    %20 = vector.load %arg13[%c0_21, %c0_22] : memref<80x32xf32, #tpu.memory_space<vmem>>, vector<80x32xf32>
    tpu.vector_store %arg13[%c0_21, %c0_22], %19 {strides = array<i32>} : memref<80x32xf32, #tpu.memory_space<vmem>>, vector<80x32xf32>,
    %c0_23 = arith.constant 0 : index
    %c0_24 = arith.constant 0 : index
    %21 = vector.load %arg9[%c0_23, %c0_24] : memref<32x32xf32, #tpu.memory_space<vmem>>, vector<32x32xf32>
    %cst_25 = arith.constant dense<0.000000e+00> : vector<80x32xf32>
    %22 = tpu.matmul %2, %21, %cst_25 {dimension_numbers = #tpu.dot_dimension_numbers<[1], [0], [0], [1], [0, 0, 1, 1], [], []>} : vector<80x32xf32>, vector<32x32xf32>, vector<80x32xf32> -> vector<80x32xf32>
    %c0_26 = arith.constant 0 : index
    %c0_27 = arith.constant 0 : index
    %23 = vector.load %arg10[%c0_26, %c0_27] : memref<1x32xf32, #tpu.memory_space<vmem>>, vector<1x32xf32>
    %24 = vector.broadcast %23 : vector<1x32xf32> to vector<80x32xf32>
    %25 = arith.addf %22, %24 : vector<80x32xf32>
    %c0_28 = arith.constant 0 : index
    %c0_29 = arith.constant 0 : index
    %26 = vector.load %arg14[%c0_28, %c0_29] : memref<80x32xf32, #tpu.memory_space<vmem>>, vector<80x32xf32>
    tpu.vector_store %arg14[%c0_28, %c0_29], %25 {strides = array<i32>} : memref<80x32xf32, #tpu.memory_space<vmem>>, vector<80x32xf32>,
    return
  }
  func.func @transform_0(%arg0: i32) -> (i32, i32) {
    %c0_i32 = arith.constant 0 : i32
    %c0_i32_0 = arith.constant 0 : i32
    return %arg0, %c0_i32 : i32, i32
  }
  func.func @transform_1(%arg0: i32) -> (i32, i32) {
    %c0_i32 = arith.constant 0 : i32
    %c0_i32_0 = arith.constant 0 : i32
    return %arg0, %c0_i32 : i32, i32
  }
  func.func @transform_2(%arg0: i32) -> (i32, i32) {
    %c0_i32 = arith.constant 0 : i32
    %c0_i32_0 = arith.constant 0 : i32
    %c0_i32_1 = arith.constant 0 : i32
    return %c0_i32, %c0_i32_0 : i32, i32
  }
  func.func @transform_3(%arg0: i32) -> (i32, i32) {
    %c0_i32 = arith.constant 0 : i32
    %c0_i32_0 = arith.constant 0 : i32
    %c0_i32_1 = arith.constant 0 : i32
    return %c0_i32, %c0_i32_0 : i32, i32
  }
  func.func @transform_4(%arg0: i32) -> (i32, i32) {
    %c0_i32 = arith.constant 0 : i32
    %c0_i32_0 = arith.constant 0 : i32
    %c0_i32_1 = arith.constant 0 : i32
    return %c0_i32, %c0_i32_0 : i32, i32
  }
  func.func @transform_5(%arg0: i32) -> (i32, i32) {
    %c0_i32 = arith.constant 0 : i32
    %c0_i32_0 = arith.constant 0 : i32
    %c0_i32_1 = arith.constant 0 : i32
    return %c0_i32, %c0_i32_0 : i32, i32
  }
  func.func @transform_6(%arg0: i32) -> (i32, i32) {
    %c0_i32 = arith.constant 0 : i32
    %c0_i32_0 = arith.constant 0 : i32
    %c0_i32_1 = arith.constant 0 : i32
    return %c0_i32, %c0_i32_0 : i32, i32
  }
  func.func @transform_7(%arg0: i32) -> (i32, i32) {
    %c0_i32 = arith.constant 0 : i32
    %c0_i32_0 = arith.constant 0 : i32
    %c0_i32_1 = arith.constant 0 : i32
    return %c0_i32, %c0_i32_0 : i32, i32
  }
  func.func @transform_8(%arg0: i32) -> (i32, i32) {
    %c0_i32 = arith.constant 0 : i32
    %c0_i32_0 = arith.constant 0 : i32
    %c0_i32_1 = arith.constant 0 : i32
    return %c0_i32, %c0_i32_0 : i32, i32
  }
  func.func @transform_9(%arg0: i32) -> (i32, i32) {
    %c0_i32 = arith.constant 0 : i32
    %c0_i32_0 = arith.constant 0 : i32
    %c0_i32_1 = arith.constant 0 : i32
    return %c0_i32, %c0_i32_0 : i32, i32
  }
  func.func @transform_10(%arg0: i32) -> (i32, i32) {
    %c0_i32 = arith.constant 0 : i32
    %c0_i32_0 = arith.constant 0 : i32
    return %arg0, %c0_i32 : i32, i32
  }
  func.func @transform_11(%arg0: i32) -> (i32, i32) {
    %c0_i32 = arith.constant 0 : i32
    %c0_i32_0 = arith.constant 0 : i32
    return %arg0, %c0_i32 : i32, i32
  }
  func.func @transform_12(%arg0: i32) -> (i32, i32) {
    %c0_i32 = arith.constant 0 : i32
    %c0_i32_0 = arith.constant 0 : i32
    return %arg0, %c0_i32 : i32, i32
  }
  func.func @transform_13(%arg0: i32) -> (i32, i32) {
    %c0_i32 = arith.constant 0 : i32
    %c0_i32_0 = arith.constant 0 : i32
    return %arg0, %c0_i32 : i32, i32
  }
}

</mosaic_0001>

<llo_original>
// kernel: tpu_custom_call.1
$region0: #{tpu_custom_call.1}
  #allocation0 [shape = 'u32[]', space=smem, size = 0x4, offset = 0x4, fixed_abs, tag = 'smem constant byte address 0x4 - core index']
  #allocation1 [shape = 'u32[144,128]{1,0:T(1,128)}', space=vmem, size = 0x12000, scoped, tag = 'internal scratch']
  %s0 = inlined_call_operand.vmem [shape: f32[160,32], index: 0, kind: input, shape index: {}]
  %s1 = inlined_call_operand.vmem [shape: f32[160,32], index: 1, kind: input, shape index: {}]
  %s2 = inlined_call_operand.vmem [shape: f32[32,32], index: 2, kind: input, shape index: {}]
  %s3 = inlined_call_operand.vmem [shape: f32[1,32], index: 3, kind: input, shape index: {}]
  %s4 = inlined_call_operand.vmem [shape: f32[32,32], index: 4, kind: input, shape index: {}]
  %s5 = inlined_call_operand.vmem [shape: f32[1,32], index: 5, kind: input, shape index: {}]
  %s6 = inlined_call_operand.vmem [shape: f32[32,32], index: 6, kind: input, shape index: {}]
  %s7 = inlined_call_operand.vmem [shape: f32[1,32], index: 7, kind: input, shape index: {}]
  %s8 = inlined_call_operand.vmem [shape: f32[32,32], index: 8, kind: input, shape index: {}]
  %s9 = inlined_call_operand.vmem [shape: f32[1,32], index: 9, kind: input, shape index: {}]
  %s10 = inlined_call_operand.vmem [shape: f32[160,32], index: 10, kind: output, shape index: {0}]
  %s11 = inlined_call_operand.vmem [shape: f32[160,32], index: 11, kind: output, shape index: {1}]
  %s12 = inlined_call_operand.vmem [shape: f32[160,32], index: 12, kind: output, shape index: {2}]
  %s13 = inlined_call_operand.vmem [shape: f32[160,32], index: 13, kind: output, shape index: {3}]
  %14 = xla_tuple %s10, %s11, %s12, %s13
  %s15 = sld [smem:[#allocation0]]
  $region97: #{tpu_custom_call.1} parent=0
    _
  %s17 = ssub.s32 1, %s15
  %s18 = scalar_select 0, %s17, %s15
  loop: start=0, step=1, limit=4
  $region2: #{tpu_custom_call.1} parent=0 // loop_pre_header
    _
  $region3: #{tpu_custom_call.1} parent=0 // loop_header
    %s20 = sphi 0, %s24
    %p21 = scmp.ge.s32.totalorder %s20, 4
    %s30 = sphi 0, %s32
    %s33 = sphi 0, %s30
    %s34 = sphi 0, %s33
    %s50 = sphi 0, %s34
    %s56 = sphi 0, %s58
    %s59 = sphi 0, %s56
    %s60 = sphi 0, %s59
    %s76 = sphi 0, %s60
    %s80 = sphi 0, %s80
    %s82 = sphi 0, %s80
    %s83 = sphi 0, %s82
    %s97 = sphi 0, %s83
    %s101 = sphi 0, %s101
    %s103 = sphi 0, %s101
    %s104 = sphi 0, %s103
    %s118 = sphi 0, %s104
    %s122 = sphi 0, %s122
    %s124 = sphi 0, %s122
    %s125 = sphi 0, %s124
    %s139 = sphi 0, %s125
    %s143 = sphi 0, %s143
    %s145 = sphi 0, %s143
    %s146 = sphi 0, %s145
    %s160 = sphi 0, %s146
    %s164 = sphi 0, %s164
    %s166 = sphi 0, %s164
    %s167 = sphi 0, %s166
    %s181 = sphi 0, %s167
    %s185 = sphi 0, %s185
    %s187 = sphi 0, %s185
    %s188 = sphi 0, %s187
    %s202 = sphi 0, %s188
    %s206 = sphi 0, %s206
    %s208 = sphi 0, %s206
    %s209 = sphi 0, %s208
    %s223 = sphi 0, %s209
    %s227 = sphi 0, %s227
    %s229 = sphi 0, %s227
    %s230 = sphi 0, %s229
    %s244 = sphi 0, %s230
    %s250 = sphi 0, %s252
    %s253 = sphi 0, %s250
    %s254 = sphi 0, %s253
    %s270 = sphi 0, %s254
    %s276 = sphi 0, %s278
    %s279 = sphi 0, %s276
    %s280 = sphi 0, %s279
    %s296 = sphi 0, %s280
    %s302 = sphi 0, %s304
    %s305 = sphi 0, %s302
    %s306 = sphi 0, %s305
    %s322 = sphi 0, %s306
    %s328 = sphi 0, %s330
    %s331 = sphi 0, %s328
    %s332 = sphi 0, %s331
    %s348 = sphi 0, %s332
  $region4: #{tpu_custom_call.1} parent=0 // loop_header_branch
    %23 = sbr.rel (%p21) target = $region8
  $region5: #{tpu_custom_call.1} parent=0 // loop_body
    %s25 = ssub.s32 %s20, 1
    %s26 = ssub.s32 %s20, 2
    %s27 = sadd.s32 %s20, 1
    %s28 = ssub.s32 %s20, %s27
    %p29 = scmp.eq.s32.totalorder %s28, 0
    %s31 = sadd.s32 %s30, 1
    %s32 = scalar_select %p29, %s30, %s31
    %p35 = pneg %p29
    %p36 = scmp.eq.s32.totalorder %s20, 1
    %p37 = por %p35, %p36
    %p38 = scmp.ne.s32.totalorder %s30, %s33
    %p39 = scmp.eq.s32.totalorder %s20, 0
    %p40 = por %p38, %p39
    %p41 = scmp.ne.s32.totalorder %s30, %s33
    %p42 = scmp.eq.s32.totalorder %s25, 1
    %p43 = por %p41, %p42
    %p44 = scmp.ne.s32.totalorder %s33, %s34
    %p45 = scmp.eq.s32.totalorder %s25, 0
    %p46 = por %p44, %p45
    %p47 = scmp.ne.s32.totalorder %s33, %s34
    %p48 = scmp.eq.s32.totalorder %s26, 1
    %p49 = por %p47, %p48
    %p51 = scmp.ne.s32.totalorder %s34, %s50
    %p52 = scmp.eq.s32.totalorder %s26, 0
    %p53 = por %p51, %p52
    %s54 = ssub.s32 %s20, %s27
    %p55 = scmp.eq.s32.totalorder %s54, 0
    %s57 = sadd.s32 %s56, 1
    %s58 = scalar_select %p55, %s56, %s57
    %p61 = pneg %p55
    %p62 = scmp.eq.s32.totalorder %s20, 1
    %p63 = por %p61, %p62
    %p64 = scmp.ne.s32.totalorder %s56, %s59
    %p65 = scmp.eq.s32.totalorder %s20, 0
    %p66 = por %p64, %p65
    %p67 = scmp.ne.s32.totalorder %s56, %s59
    %p68 = scmp.eq.s32.totalorder %s25, 1
    %p69 = por %p67, %p68
    %p70 = scmp.ne.s32.totalorder %s59, %s60
    %p71 = scmp.eq.s32.totalorder %s25, 0
    %p72 = por %p70, %p71
    %p73 = scmp.ne.s32.totalorder %s59, %s60
    %p74 = scmp.eq.s32.totalorder %s26, 1
    %p75 = por %p73, %p74
    %p77 = scmp.ne.s32.totalorder %s60, %s76
    %p78 = scmp.eq.s32.totalorder %s26, 0
    %p79 = por %p77, %p78
    %s81 = sadd.s32 %s80, 1
    %p84 = scmp.eq.s32.totalorder %s20, 1
    %p85 = scmp.ne.s32.totalorder %s80, %s82
    %p86 = scmp.eq.s32.totalorder %s20, 0
    %p87 = por %p85, %p86
    %p88 = scmp.ne.s32.totalorder %s80, %s82
    %p89 = scmp.eq.s32.totalorder %s25, 1
    %p90 = por %p88, %p89
    %p91 = scmp.ne.s32.totalorder %s82, %s83
    %p92 = scmp.eq.s32.totalorder %s25, 0
    %p93 = por %p91, %p92
    %p94 = scmp.ne.s32.totalorder %s82, %s83
    %p95 = scmp.eq.s32.totalorder %s26, 1
    %p96 = por %p94, %p95
    %p98 = scmp.ne.s32.totalorder %s83, %s97
    %p99 = scmp.eq.s32.totalorder %s26, 0
    %p100 = por %p98, %p99
    %s102 = sadd.s32 %s101, 1
    %p105 = scmp.eq.s32.totalorder %s20, 1
    %p106 = scmp.ne.s32.totalorder %s101, %s103
    %p107 = scmp.eq.s32.totalorder %s20, 0
    %p108 = por %p106, %p107
    %p109 = scmp.ne.s32.totalorder %s101, %s103
    %p110 = scmp.eq.s32.totalorder %s25, 1
    %p111 = por %p109, %p110
    %p112 = scmp.ne.s32.totalorder %s103, %s104
    %p113 = scmp.eq.s32.totalorder %s25, 0
    %p114 = por %p112, %p113
    %p115 = scmp.ne.s32.totalorder %s103, %s104
    %p116 = scmp.eq.s32.totalorder %s26, 1
    %p117 = por %p115, %p116
    %p119 = scmp.ne.s32.totalorder %s104, %s118
    %p120 = scmp.eq.s32.totalorder %s26, 0
    %p121 = por %p119, %p120
    %s123 = sadd.s32 %s122, 1
    %p126 = scmp.eq.s32.totalorder %s20, 1
    %p127 = scmp.ne.s32.totalorder %s122, %s124
    %p128 = scmp.eq.s32.totalorder %s20, 0
    %p129 = por %p127, %p128
    %p130 = scmp.ne.s32.totalorder %s122, %s124
    %p131 = scmp.eq.s32.totalorder %s25, 1
    %p132 = por %p130, %p131
    %p133 = scmp.ne.s32.totalorder %s124, %s125
    %p134 = scmp.eq.s32.totalorder %s25, 0
    %p135 = por %p133, %p134
    %p136 = scmp.ne.s32.totalorder %s124, %s125
    %p137 = scmp.eq.s32.totalorder %s26, 1
    %p138 = por %p136, %p137
    %p140 = scmp.ne.s32.totalorder %s125, %s139
    %p141 = scmp.eq.s32.totalorder %s26, 0
    %p142 = por %p140, %p141
    %s144 = sadd.s32 %s143, 1
    %p147 = scmp.eq.s32.totalorder %s20, 1
    %p148 = scmp.ne.s32.totalorder %s143, %s145
    %p149 = scmp.eq.s32.totalorder %s20, 0
    %p150 = por %p148, %p149
    %p151 = scmp.ne.s32.totalorder %s143, %s145
    %p152 = scmp.eq.s32.totalorder %s25, 1
    %p153 = por %p151, %p152
    %p154 = scmp.ne.s32.totalorder %s145, %s146
    %p155 = scmp.eq.s32.totalorder %s25, 0
    %p156 = por %p154, %p155
    %p157 = scmp.ne.s32.totalorder %s145, %s146
    %p158 = scmp.eq.s32.totalorder %s26, 1
    %p159 = por %p157, %p158
    %p161 = scmp.ne.s32.totalorder %s146, %s160
    %p162 = scmp.eq.s32.totalorder %s26, 0
    %p163 = por %p161, %p162
    %s165 = sadd.s32 %s164, 1
    %p168 = scmp.eq.s32.totalorder %s20, 1
    %p169 = scmp.ne.s32.totalorder %s164, %s166
    %p170 = scmp.eq.s32.totalorder %s20, 0
    %p171 = por %p169, %p170
    %p172 = scmp.ne.s32.totalorder %s164, %s166
    %p173 = scmp.eq.s32.totalorder %s25, 1
    %p174 = por %p172, %p173
    %p175 = scmp.ne.s32.totalorder %s166, %s167
    %p176 = scmp.eq.s32.totalorder %s25, 0
    %p177 = por %p175, %p176
    %p178 = scmp.ne.s32.totalorder %s166, %s167
    %p179 = scmp.eq.s32.totalorder %s26, 1
    %p180 = por %p178, %p179
    %p182 = scmp.ne.s32.totalorder %s167, %s181
    %p183 = scmp.eq.s32.totalorder %s26, 0
    %p184 = por %p182, %p183
    %s186 = sadd.s32 %s185, 1
    %p189 = scmp.eq.s32.totalorder %s20, 1
    %p190 = scmp.ne.s32.totalorder %s185, %s187
    %p191 = scmp.eq.s32.totalorder %s20, 0
    %p192 = por %p190, %p191
    %p193 = scmp.ne.s32.totalorder %s185, %s187
    %p194 = scmp.eq.s32.totalorder %s25, 1
    %p195 = por %p193, %p194
    %p196 = scmp.ne.s32.totalorder %s187, %s188
    %p197 = scmp.eq.s32.totalorder %s25, 0
    %p198 = por %p196, %p197
    %p199 = scmp.ne.s32.totalorder %s187, %s188
    %p200 = scmp.eq.s32.totalorder %s26, 1
    %p201 = por %p199, %p200
    %p203 = scmp.ne.s32.totalorder %s188, %s202
    %p204 = scmp.eq.s32.totalorder %s26, 0
    %p205 = por %p203, %p204
    %s207 = sadd.s32 %s206, 1
    %p210 = scmp.eq.s32.totalorder %s20, 1
    %p211 = scmp.ne.s32.totalorder %s206, %s208
    %p212 = scmp.eq.s32.totalorder %s20, 0
    %p213 = por %p211, %p212
    %p214 = scmp.ne.s32.totalorder %s206, %s208
    %p215 = scmp.eq.s32.totalorder %s25, 1
    %p216 = por %p214, %p215
    %p217 = scmp.ne.s32.totalorder %s208, %s209
    %p218 = scmp.eq.s32.totalorder %s25, 0
    %p219 = por %p217, %p218
    %p220 = scmp.ne.s32.totalorder %s208, %s209
    %p221 = scmp.eq.s32.totalorder %s26, 1
    %p222 = por %p220, %p221
    %p224 = scmp.ne.s32.totalorder %s209, %s223
    %p225 = scmp.eq.s32.totalorder %s26, 0
    %p226 = por %p224, %p225
    %s228 = sadd.s32 %s227, 1
    %p231 = scmp.eq.s32.totalorder %s20, 1
    %p232 = scmp.ne.s32.totalorder %s227, %s229
    %p233 = scmp.eq.s32.totalorder %s20, 0
    %p234 = por %p232, %p233
    %p235 = scmp.ne.s32.totalorder %s227, %s229
    %p236 = scmp.eq.s32.totalorder %s25, 1
    %p237 = por %p235, %p236
    %p238 = scmp.ne.s32.totalorder %s229, %s230
    %p239 = scmp.eq.s32.totalorder %s25, 0
    %p240 = por %p238, %p239
    %p241 = scmp.ne.s32.totalorder %s229, %s230
    %p242 = scmp.eq.s32.totalorder %s26, 1
    %p243 = por %p241, %p242
    %p245 = scmp.ne.s32.totalorder %s230, %s244
    %p246 = scmp.eq.s32.totalorder %s26, 0
    %p247 = por %p245, %p246
    %s248 = ssub.s32 %s20, %s27
    %p249 = scmp.eq.s32.totalorder %s248, 0
    %s251 = sadd.s32 %s250, 1
    %s252 = scalar_select %p249, %s250, %s251
    %p255 = pneg %p249
    %p256 = scmp.eq.s32.totalorder %s20, 1
    %p257 = por %p255, %p256
    %p258 = scmp.ne.s32.totalorder %s250, %s253
    %p259 = scmp.eq.s32.totalorder %s20, 0
    %p260 = por %p258, %p259
    %p261 = scmp.ne.s32.totalorder %s250, %s253
    %p262 = scmp.eq.s32.totalorder %s25, 1
    %p263 = por %p261, %p262
    %p264 = scmp.ne.s32.totalorder %s253, %s254
    %p265 = scmp.eq.s32.totalorder %s25, 0
    %p266 = por %p264, %p265
    %p267 = scmp.ne.s32.totalorder %s253, %s254
    %p268 = scmp.eq.s32.totalorder %s26, 1
    %p269 = por %p267, %p268
    %p271 = scmp.ne.s32.totalorder %s254, %s270
    %p272 = scmp.eq.s32.totalorder %s26, 0
    %p273 = por %p271, %p272
    %s274 = ssub.s32 %s20, %s27
    %p275 = scmp.eq.s32.totalorder %s274, 0
    %s277 = sadd.s32 %s276, 1
    %s278 = scalar_select %p275, %s276, %s277
    %p281 = pneg %p275
    %p282 = scmp.eq.s32.totalorder %s20, 1
    %p283 = por %p281, %p282
    %p284 = scmp.ne.s32.totalorder %s276, %s279
    %p285 = scmp.eq.s32.totalorder %s20, 0
    %p286 = por %p284, %p285
    %p287 = scmp.ne.s32.totalorder %s276, %s279
    %p288 = scmp.eq.s32.totalorder %s25, 1
    %p289 = por %p287, %p288
    %p290 = scmp.ne.s32.totalorder %s279, %s280
    %p291 = scmp.eq.s32.totalorder %s25, 0
    %p292 = por %p290, %p291
    %p293 = scmp.ne.s32.totalorder %s279, %s280
    %p294 = scmp.eq.s32.totalorder %s26, 1
    %p295 = por %p293, %p294
    %p297 = scmp.ne.s32.totalorder %s280, %s296
    %p298 = scmp.eq.s32.totalorder %s26, 0
    %p299 = por %p297, %p298
    %s300 = ssub.s32 %s20, %s27
    %p301 = scmp.eq.s32.totalorder %s300, 0
    %s303 = sadd.s32 %s302, 1
    %s304 = scalar_select %p301, %s302, %s303
    %p307 = pneg %p301
    %p308 = scmp.eq.s32.totalorder %s20, 1
    %p309 = por %p307, %p308
    %p310 = scmp.ne.s32.totalorder %s302, %s305
    %p311 = scmp.eq.s32.totalorder %s20, 0
    %p312 = por %p310, %p311
    %p313 = scmp.ne.s32.totalorder %s302, %s305
    %p314 = scmp.eq.s32.totalorder %s25, 1
    %p315 = por %p313, %p314
    %p316 = scmp.ne.s32.totalorder %s305, %s306
    %p317 = scmp.eq.s32.totalorder %s25, 0
    %p318 = por %p316, %p317
    %p319 = scmp.ne.s32.totalorder %s305, %s306
    %p320 = scmp.eq.s32.totalorder %s26, 1
    %p321 = por %p319, %p320
    %p323 = scmp.ne.s32.totalorder %s306, %s322
    %p324 = scmp.eq.s32.totalorder %s26, 0
    %p325 = por %p323, %p324
    %s326 = ssub.s32 %s20, %s27
    %p327 = scmp.eq.s32.totalorder %s326, 0
    %s329 = sadd.s32 %s328, 1
    %s330 = scalar_select %p327, %s328, %s329
    %p333 = pneg %p327
    %p334 = scmp.eq.s32.totalorder %s20, 1
    %p335 = por %p333, %p334
    %p336 = scmp.ne.s32.totalorder %s328, %s331
    %p337 = scmp.eq.s32.totalorder %s20, 0
    %p338 = por %p336, %p337
    %p339 = scmp.ne.s32.totalorder %s328, %s331
    %p340 = scmp.eq.s32.totalorder %s25, 1
    %p341 = por %p339, %p340
    %p342 = scmp.ne.s32.totalorder %s331, %s332
    %p343 = scmp.eq.s32.totalorder %s25, 0
    %p344 = por %p342, %p343
    %p345 = scmp.ne.s32.totalorder %s331, %s332
    %p346 = scmp.eq.s32.totalorder %s26, 1
    %p347 = por %p345, %p346
    %p349 = scmp.ne.s32.totalorder %s332, %s348
    %p350 = scmp.eq.s32.totalorder %s26, 0
    %p351 = por %p349, %p350
    %p352 = scmp.le.s32.totalorder 1, %s20
    %p353 = scmp.lt.s32.totalorder %s20, 3
    %p354 = pnand %p352, %p353
    %p355 = pneg %p354
    // Predicated region
    $region9: #{tpu_custom_call.1} parent=5 // pred_check
      _
    $region10: #{tpu_custom_call.1} parent=5 // pred_check_branch
      %357 = sbr.rel (%p354) target = $region12
    $region11: #{tpu_custom_call.1} parent=5 // pred_region
      %s358 = ssub.s32 %s20, 1
      // Predicated region
      $region13: #{tpu_custom_call.1} parent=11 // pred_check
        %p359 = pneg %p93
      $region14: #{tpu_custom_call.1} parent=11 // pred_check_branch
        %361 = sbr.rel (%p359) target = $region16
      $region15: #{tpu_custom_call.1} parent=11 // pred_region
        _
      $region16: #{tpu_custom_call.1} parent=11 // pred_fallthru
        _
      // Predicated region
      $region17: #{tpu_custom_call.1} parent=11 // pred_check
        %p362 = pneg %p114
      $region18: #{tpu_custom_call.1} parent=11 // pred_check_branch
        %364 = sbr.rel (%p362) target = $region20
      $region19: #{tpu_custom_call.1} parent=11 // pred_region
        _
      $region20: #{tpu_custom_call.1} parent=11 // pred_fallthru
        _
      // Predicated region
      $region21: #{tpu_custom_call.1} parent=11 // pred_check
        %p365 = pneg %p135
      $region22: #{tpu_custom_call.1} parent=11 // pred_check_branch
        %367 = sbr.rel (%p365) target = $region24
      $region23: #{tpu_custom_call.1} parent=11 // pred_region
        _
      $region24: #{tpu_custom_call.1} parent=11 // pred_fallthru
        _
      // Predicated region
      $region25: #{tpu_custom_call.1} parent=11 // pred_check
        %p368 = pneg %p156
      $region26: #{tpu_custom_call.1} parent=11 // pred_check_branch
        %370 = sbr.rel (%p368) target = $region28
      $region27: #{tpu_custom_call.1} parent=11 // pred_region
        _
      $region28: #{tpu_custom_call.1} parent=11 // pred_fallthru
        _
      // Predicated region
      $region29: #{tpu_custom_call.1} parent=11 // pred_check
        %p371 = pneg %p177
      $region30: #{tpu_custom_call.1} parent=11 // pred_check_branch
        %373 = sbr.rel (%p371) target = $region32
      $region31: #{tpu_custom_call.1} parent=11 // pred_region
        _
      $region32: #{tpu_custom_call.1} parent=11 // pred_fallthru
        _
      // Predicated region
      $region33: #{tpu_custom_call.1} parent=11 // pred_check
        %p374 = pneg %p198
      $region34: #{tpu_custom_call.1} parent=11 // pred_check_branch
        %376 = sbr.rel (%p374) target = $region36
      $region35: #{tpu_custom_call.1} parent=11 // pred_region
        _
      $region36: #{tpu_custom_call.1} parent=11 // pred_fallthru
        _
      // Predicated region
      $region37: #{tpu_custom_call.1} parent=11 // pred_check
        %p377 = pneg %p219
      $region38: #{tpu_custom_call.1} parent=11 // pred_check_branch
        %379 = sbr.rel (%p377) target = $region40
      $region39: #{tpu_custom_call.1} parent=11 // pred_region
        _
      $region40: #{tpu_custom_call.1} parent=11 // pred_fallthru
        _
      // Predicated region
      $region41: #{tpu_custom_call.1} parent=11 // pred_check
        %p380 = pneg %p240
      $region42: #{tpu_custom_call.1} parent=11 // pred_check_branch
        %382 = sbr.rel (%p380) target = $region44
      $region43: #{tpu_custom_call.1} parent=11 // pred_region
        _
      $region44: #{tpu_custom_call.1} parent=11 // pred_fallthru
        _
    $region12: #{tpu_custom_call.1} parent=5 // pred_fallthru
      _
    %p383 = scmp.lt.s32.totalorder %s20, 2
    // Predicated region
    $region45: #{tpu_custom_call.1} parent=5 // pred_check
      %p384 = pneg %p383
    $region46: #{tpu_custom_call.1} parent=5 // pred_check_branch
      %386 = sbr.rel (%p384) target = $region48
    $region47: #{tpu_custom_call.1} parent=5 // pred_region
      // Predicated region
      $region49: #{tpu_custom_call.1} parent=47 // pred_check
        %p387 = pneg %p40
      $region50: #{tpu_custom_call.1} parent=47 // pred_check_branch
        %389 = sbr.rel (%p387) target = $region52
      $region51: #{tpu_custom_call.1} parent=47 // pred_region
        %s390 = smul.u32 10, %s20
        %p391 = scmp.lt.s32.totalorder %s390, 19
        %s392 = scalar_select %p391, %s390, 19
        %s393 = smul.addr %s392, 8
        %s394 = scalar_lea.vmem %s0, %s393
        %s395 = smul.u32 10, %s20
      $region52: #{tpu_custom_call.1} parent=47 // pred_fallthru
        _
      // Predicated region
      $region53: #{tpu_custom_call.1} parent=47 // pred_check
        %p396 = pneg %p66
      $region54: #{tpu_custom_call.1} parent=47 // pred_check_branch
        %398 = sbr.rel (%p396) target = $region56
      $region55: #{tpu_custom_call.1} parent=47 // pred_region
        %s399 = smul.u32 10, %s20
        %p400 = scmp.lt.s32.totalorder %s399, 19
        %s401 = scalar_select %p400, %s399, 19
        %s402 = smul.addr %s401, 8
        %s403 = scalar_lea.vmem %s1, %s402
        %s404 = smul.u32 10, %s20
      $region56: #{tpu_custom_call.1} parent=47 // pred_fallthru
        _
    $region48: #{tpu_custom_call.1} parent=5 // pred_fallthru
      _
    %p405 = scmp.le.s32.totalorder 1, %s20
    %p406 = scmp.lt.s32.totalorder %s20, 3
    %p407 = pnand %p405, %p406
    %p408 = pneg %p407
    // Predicated region
    $region57: #{tpu_custom_call.1} parent=5 // pred_check
      _
    $region58: #{tpu_custom_call.1} parent=5 // pred_check_branch
      %410 = sbr.rel (%p407) target = $region60
    $region59: #{tpu_custom_call.1} parent=5 // pred_region
      %s411 = ssub.s32 %s20, 1
      %s412 = smul.u32 10, %s25
      %p413 = scmp.lt.s32.totalorder %s412, 19
      %s414 = scalar_select %p413, %s412, 19
      %s415 = smul.addr %s414, 8
      %s416 = scalar_lea.vmem %s0, %s415
      %p417 = pneg %p46
      %p418 = pneg %p43
      %s419 = smul.u32 10, %s25
      %p420 = scmp.lt.s32.totalorder %s419, 19
      %s421 = scalar_select %p420, %s419, 19
      %s422 = smul.addr %s421, 8
      %s423 = scalar_lea.vmem %s1, %s422
      %p424 = pneg %p72
      %p425 = pneg %p69
      %p426 = pneg %p93
      %p427 = pneg %p90
      %p428 = pneg %p114
      %p429 = pneg %p111
      %p430 = pneg %p135
      %p431 = pneg %p132
      %p432 = pneg %p156
      %p433 = pneg %p153
      %p434 = pneg %p177
      %p435 = pneg %p174
      %p436 = pneg %p198
      %p437 = pneg %p195
      %p438 = pneg %p219
      %p439 = pneg %p216
      %p440 = pneg %p240
      %p441 = pneg %p237
      %p442 = pneg %p266
      %p443 = pneg %p263
      %s444 = smul.u32 10, %s25
      %p445 = scmp.lt.s32.totalorder %s444, 19
      %s446 = scalar_select %p445, %s444, 19
      %s447 = smul.addr %s446, 8
      %s448 = scalar_lea.vmem %s10, %s447
      %p449 = pneg %p292
      %p450 = pneg %p289
      %s451 = smul.u32 10, %s25
      %p452 = scmp.lt.s32.totalorder %s451, 19
      %s453 = scalar_select %p452, %s451, 19
      %s454 = smul.addr %s453, 8
      %s455 = scalar_lea.vmem %s11, %s454
      %p456 = pneg %p318
      %p457 = pneg %p315
      %s458 = smul.u32 10, %s25
      %p459 = scmp.lt.s32.totalorder %s458, 19
      %s460 = scalar_select %p459, %s458, 19
      %s461 = smul.addr %s460, 8
      %s462 = scalar_lea.vmem %s12, %s461
      %p463 = pneg %p344
      %p464 = pneg %p341
      %s465 = smul.u32 10, %s25
      %p466 = scmp.lt.s32.totalorder %s465, 19
      %s467 = scalar_select %p466, %s465, 19
      %s468 = smul.addr %s467, 8
      %s469 = scalar_lea.vmem %s13, %s468
      %s470 = smul.u32 10, %s25
      %p471 = scmp.lt.s32.totalorder %s470, 19
      %s472 = scalar_select %p471, %s470, 19
      %s473 = smul.addr %s472, 8
      %s474 = scalar_lea.vmem %s0, %s473
      %s475 = smul.u32 10, %s25
      %s476 = smul.u32 10, %s25
      %p477 = scmp.lt.s32.totalorder %s476, 19
      %s478 = scalar_select %p477, %s476, 19
      %s479 = smul.addr %s478, 8
      %s480 = scalar_lea.vmem %s1, %s479
      %s481 = smul.u32 10, %s25
      %s482 = smul.u32 10, %s25
      %p483 = scmp.lt.s32.totalorder %s482, 19
      %s484 = scalar_select %p483, %s482, 19
      %s485 = smul.addr %s484, 8
      %s486 = scalar_lea.vmem %s10, %s485
      %s487 = smul.u32 10, %s25
      %s488 = smul.u32 10, %s25
      %p489 = scmp.lt.s32.totalorder %s488, 19
      %s490 = scalar_select %p489, %s488, 19
      %s491 = smul.addr %s490, 8
      %s492 = scalar_lea.vmem %s11, %s491
      %s493 = smul.u32 10, %s25
      %s494 = smul.u32 10, %s25
      %p495 = scmp.lt.s32.totalorder %s494, 19
      %s496 = scalar_select %p495, %s494, 19
      %s497 = smul.addr %s496, 8
      %s498 = scalar_lea.vmem %s12, %s497
      %s499 = smul.u32 10, %s25
      %s500 = smul.u32 10, %s25
      %p501 = scmp.lt.s32.totalorder %s500, 19
      %s502 = scalar_select %p501, %s500, 19
      %s503 = smul.addr %s502, 8
      %s504 = scalar_lea.vmem %s13, %s503
      %s505 = smul.u32 10, %s25
      %v506 = vld [vmem:[%s474] sm:$0xff]
      %v507 = vld [vmem:[%s474 + $0x8] sm:$0xff]
      %v508 = vld [vmem:[%s474 + $0x10] sm:$0xff]
      %v509 = vld [vmem:[%s474 + $0x18] sm:$0xff]
      %v510 = vld [vmem:[%s474 + $0x20] sm:$0xff]
      %v511 = vld [vmem:[%s474 + $0x28] sm:$0xff]
      %v512 = vld [vmem:[%s474 + $0x30] sm:$0xff]
      %v513 = vld [vmem:[%s474 + $0x38] sm:$0xff]
      %v514 = vld [vmem:[%s474 + $0x40] sm:$0xff]
      %v515 = vld [vmem:[%s474 + $0x48] sm:$0xff]
      %v516 = vld [vmem:[%s480] sm:$0xff]
      %v517 = vld [vmem:[%s480 + $0x8] sm:$0xff]
      %v518 = vld [vmem:[%s480 + $0x10] sm:$0xff]
      %v519 = vld [vmem:[%s480 + $0x18] sm:$0xff]
      %v520 = vld [vmem:[%s480 + $0x20] sm:$0xff]
      %v521 = vld [vmem:[%s480 + $0x28] sm:$0xff]
      %v522 = vld [vmem:[%s480 + $0x30] sm:$0xff]
      %v523 = vld [vmem:[%s480 + $0x38] sm:$0xff]
      %v524 = vld [vmem:[%s480 + $0x40] sm:$0xff]
      %v525 = vld [vmem:[%s480 + $0x48] sm:$0xff]
      %v526 = vadd.f32 %v506, %v516
      %v527 = vadd.f32 %v507, %v517
      %v528 = vadd.f32 %v508, %v518
      %v529 = vadd.f32 %v509, %v519
      %v530 = vadd.f32 %v510, %v520
      %v531 = vadd.f32 %v511, %v521
      %v532 = vadd.f32 %v512, %v522
      %v533 = vadd.f32 %v513, %v523
      %v534 = vadd.f32 %v514, %v524
      %v535 = vadd.f32 %v515, %v525
      %v536 = vld [vmem:[%s2] sm:$0xff]
      %v537 = vld [vmem:[%s2 + $0x8] sm:$0xff]
      %v538 = vld [vmem:[%s2 + $0x10] sm:$0xff]
      %v539 = vld [vmem:[%s2 + $0x18] sm:$0xff]
      %v540 = vld [vmem:[%s3] sm:$0x1]
      %v542 = vlaneseq
      %v543 = vshrl.u32 %v542, 7
      %v544 = vsub.s32 0, %v543
      %v545 = vrot.slane %v540, %v544
      %vm547 = vcmask 261120
      %v549 = vsel %vm547, %v506, 0
      %v552 = vsel %vm547, %v507, 0
      %v555 = vsel %vm547, %v508, 0
      %v558 = vsel %vm547, %v509, 0
      %v561 = vsel %vm547, %v510, 0
      %v564 = vsel %vm547, %v511, 0
      %v567 = vsel %vm547, %v512, 0
      %v570 = vsel %vm547, %v513, 0
      %v573 = vsel %vm547, %v514, 0
      %v576 = vsel %vm547, %v515, 0
      %578 = vmatprep.subr.mxu0 0.0
      %579 = vmatpush1.msra.mxu0 %v536
      %580 = vmatprep.subr.mxu0 0.0
      %581 = vmatpush1.msra.mxu0 %v537
      %582 = vmatprep.subr.mxu0 0.0
      %583 = vmatpush1.msra.mxu0 %v538
      %584 = vmatprep.subr.mxu0 0.0
      %585 = vmatpush1.msra.mxu0 %v539
      %586 = vmatprep.subr.mxu0 0.0
      %587 = vmatpush1.msra.mxu0 0.0
      %588 = vmatprep.subr.mxu0 0.0
      %589 = vmatpush1.msra.mxu0 0.0
      %590 = vmatprep.subr.mxu0 0.0
      %591 = vmatpush1.msra.mxu0 0.0
      %592 = vmatprep.subr.mxu0 0.0
      %593 = vmatpush1.msra.mxu0 0.0
      %594 = vmatprep.subr.mxu0 0.0
      %595 = vmatpush1.msra.mxu0 0.0
      %596 = vmatprep.subr.mxu0 0.0
      %597 = vmatpush1.msra.mxu0 0.0
      %598 = vmatprep.subr.mxu0 0.0
      %599 = vmatpush1.msra.mxu0 0.0
      %600 = vmatprep.subr.mxu0 0.0
      %601 = vmatpush1.msra.mxu0 0.0
      %602 = vmatprep.subr.mxu0 0.0
      %603 = vmatpush1.msra.mxu0 0.0
      %604 = vmatprep.subr.mxu0 0.0
      %605 = vmatpush1.msra.mxu0 0.0
      %606 = vmatprep.subr.mxu0 0.0
      %607 = vmatpush1.msra.mxu0 0.0
      %608 = vmatprep.subr.mxu0 0.0
      %609 = vmatpush1.msra.mxu0 0.0
      %610 = vmatprep.subr.mxu0 0.0
      %611 = vmatpush1.msra.mxu0 0.0
      %612 = vmatprep.subr.mxu0 0.0
      %613 = vmatpush1.msra.mxu0 0.0
      %614 = vmatprep.subr.mxu0 0.0
      %615 = vmatpush1.msra.mxu0 0.0
      %616 = vmatprep.subr.mxu0 0.0
      %617 = vmatpush1.msra.mxu0 0.0
      %618 = vmatprep.subr.mxu0 0.0
      %619 = vmatpush1.msra.mxu0 0.0
      %620 = vmatprep.subr.mxu0 0.0
      %621 = vmatpush1.msra.mxu0 0.0
      %622 = vmatprep.subr.mxu0 0.0
      %623 = vmatpush1.msra.mxu0 0.0
      %624 = vmatprep.subr.mxu0 0.0
      %625 = vmatpush1.msra.mxu0 0.0
      %626 = vmatprep.subr.mxu0 0.0
      %627 = vmatpush1.msra.mxu0 0.0
      %628 = vmatprep.subr.mxu0 0.0
      %629 = vmatpush1.msra.mxu0 0.0
      %630 = vmatprep.subr.mxu0 0.0
      %631 = vmatpush1.msra.mxu0 0.0
      %632 = vmatprep.subr.mxu0 0.0
      %633 = vmatpush1.msra.mxu0 0.0
      %634 = vmatprep.subr.mxu0 0.0
      %635 = vmatpush1.msra.mxu0 0.0
      %636 = vmatprep.subr.mxu0 0.0
      %637 = vmatpush1.msra.mxu0 0.0
      %638 = vmatprep.subr.mxu0 0.0
      %639 = vmatpush1.msra.mxu0 0.0
      %640 = vmatprep.subr.mxu0 0.0
      %641 = vmatpush1.msra.mxu0 0.0
      %642 = vmatprep.mubr.f32.mxu0 0.0
      %643 = vmatmul.mubr.f32.gmra.mrb[0].mxu0 %v549
      %v644 = vpop.f32.mrb[0].mxu0
      %v645 = vadd.f32 %v545, %v644
      %v646 = vpop.f32.mrb[0].mxu0
      %647 = vmatprep.mubr.f32.mxu0 0.0
      %648 = vmatmul.mubr.f32.gmra.mrb[0].mxu0 %v552
      %v649 = vpop.f32.mrb[0].mxu0
      %v650 = vadd.f32 %v545, %v649
      %v651 = vpop.f32.mrb[0].mxu0
      %652 = vmatprep.mubr.f32.mxu0 0.0
      %653 = vmatmul.mubr.f32.gmra.mrb[0].mxu0 %v555
      %v654 = vpop.f32.mrb[0].mxu0
      %v655 = vadd.f32 %v545, %v654
      %v656 = vpop.f32.mrb[0].mxu0
      %657 = vmatprep.mubr.f32.mxu0 0.0
      %658 = vmatmul.mubr.f32.gmra.mrb[0].mxu0 %v558
      %v659 = vpop.f32.mrb[0].mxu0
      %v660 = vadd.f32 %v545, %v659
      %v661 = vpop.f32.mrb[0].mxu0
      %662 = vmatprep.mubr.f32.mxu0 0.0
      %663 = vmatmul.mubr.f32.gmra.mrb[0].mxu0 %v561
      %v664 = vpop.f32.mrb[0].mxu0
      %v665 = vadd.f32 %v545, %v664
      %v666 = vpop.f32.mrb[0].mxu0
      %667 = vmatprep.mubr.f32.mxu0 0.0
      %668 = vmatmul.mubr.f32.gmra.mrb[0].mxu0 %v564
      %v669 = vpop.f32.mrb[0].mxu0
      %v670 = vadd.f32 %v545, %v669
      %v671 = vpop.f32.mrb[0].mxu0
      %672 = vmatprep.mubr.f32.mxu0 0.0
      %673 = vmatmul.mubr.f32.gmra.mrb[0].mxu0 %v567
      %v674 = vpop.f32.mrb[0].mxu0
      %v675 = vadd.f32 %v545, %v674
      %v676 = vpop.f32.mrb[0].mxu0
      %677 = vmatprep.mubr.f32.mxu0 0.0
      %678 = vmatmul.mubr.f32.gmra.mrb[0].mxu0 %v570
      %v679 = vpop.f32.mrb[0].mxu0
      %v680 = vadd.f32 %v545, %v679
      %v681 = vpop.f32.mrb[0].mxu0
      %682 = vmatprep.mubr.f32.mxu0 0.0
      %683 = vmatmul.mubr.f32.gmra.mrb[0].mxu0 %v573
      %v684 = vpop.f32.mrb[0].mxu0
      %v685 = vadd.f32 %v545, %v684
      %v686 = vpop.f32.mrb[0].mxu0
      %687 = vmatprep.mubr.f32.mxu0 0.0
      %688 = vmatmul.mubr.f32.gmra.mrb[0].mxu0 %v576
      %v689 = vpop.f32.mrb[0].mxu0
      %v690 = vadd.f32 %v545, %v689
      %v691 = vpop.f32.mrb[0].mxu0
      %692 = vdwg.mxu0
      %693 = vst.msk [vmem:[%s486] sm:$0xff] %vm547, %v645
      %694 = vst.msk [vmem:[%s486 + $0x8] sm:$0xff] %vm547, %v650
      %695 = vst.msk [vmem:[%s486 + $0x10] sm:$0xff] %vm547, %v655
      %696 = vst.msk [vmem:[%s486 + $0x18] sm:$0xff] %vm547, %v660
      %697 = vst.msk [vmem:[%s486 + $0x20] sm:$0xff] %vm547, %v665
      %698 = vst.msk [vmem:[%s486 + $0x28] sm:$0xff] %vm547, %v670
      %699 = vst.msk [vmem:[%s486 + $0x30] sm:$0xff] %vm547, %v675
      %700 = vst.msk [vmem:[%s486 + $0x38] sm:$0xff] %vm547, %v680
      %701 = vst.msk [vmem:[%s486 + $0x40] sm:$0xff] %vm547, %v685
      %702 = vst.msk [vmem:[%s486 + $0x48] sm:$0xff] %vm547, %v690
      %v703 = vld [vmem:[%s4] sm:$0xff]
      %v704 = vld [vmem:[%s4 + $0x8] sm:$0xff]
      %v705 = vld [vmem:[%s4 + $0x10] sm:$0xff]
      %v706 = vld [vmem:[%s4 + $0x18] sm:$0xff]
      %v707 = vld [vmem:[%s5] sm:$0x1]
      %v709 = vlaneseq
      %v710 = vshrl.u32 %v709, 7
      %v711 = vsub.s32 0, %v710
      %v712 = vrot.slane %v707, %v711
      %v715 = vsel %vm547, %v526, 0
      %v718 = vsel %vm547, %v527, 0
      %v721 = vsel %vm547, %v528, 0
      %v724 = vsel %vm547, %v529, 0
      %v727 = vsel %vm547, %v530, 0
      %v730 = vsel %vm547, %v531, 0
      %v733 = vsel %vm547, %v532, 0
      %v736 = vsel %vm547, %v533, 0
      %v739 = vsel %vm547, %v534, 0
      %v742 = vsel %vm547, %v535, 0
      %744 = vmatprep.subr.mxu0 0.0
      %745 = vmatpush1.msra.mxu0 %v703
      %746 = vmatprep.subr.mxu0 0.0
      %747 = vmatpush1.msra.mxu0 %v704
      %748 = vmatprep.subr.mxu0 0.0
      %749 = vmatpush1.msra.mxu0 %v705
      %750 = vmatprep.subr.mxu0 0.0
      %751 = vmatpush1.msra.mxu0 %v706
      %752 = vmatprep.subr.mxu0 0.0
      %753 = vmatpush1.msra.mxu0 0.0
      %754 = vmatprep.subr.mxu0 0.0
      %755 = vmatpush1.msra.mxu0 0.0
      %756 = vmatprep.subr.mxu0 0.0
      %757 = vmatpush1.msra.mxu0 0.0
      %758 = vmatprep.subr.mxu0 0.0
      %759 = vmatpush1.msra.mxu0 0.0
      %760 = vmatprep.subr.mxu0 0.0
      %761 = vmatpush1.msra.mxu0 0.0
      %762 = vmatprep.subr.mxu0 0.0
      %763 = vmatpush1.msra.mxu0 0.0
      %764 = vmatprep.subr.mxu0 0.0
      %765 = vmatpush1.msra.mxu0 0.0
      %766 = vmatprep.subr.mxu0 0.0
      %767 = vmatpush1.msra.mxu0 0.0
      %768 = vmatprep.subr.mxu0 0.0
      %769 = vmatpush1.msra.mxu0 0.0
      %770 = vmatprep.subr.mxu0 0.0
      %771 = vmatpush1.msra.mxu0 0.0
      %772 = vmatprep.subr.mxu0 0.0
      %773 = vmatpush1.msra.mxu0 0.0
      %774 = vmatprep.subr.mxu0 0.0
      %775 = vmatpush1.msra.mxu0 0.0
      %776 = vmatprep.subr.mxu0 0.0
      %777 = vmatpush1.msra.mxu0 0.0
      %778 = vmatprep.subr.mxu0 0.0
      %779 = vmatpush1.msra.mxu0 0.0
      %780 = vmatprep.subr.mxu0 0.0
      %781 = vmatpush1.msra.mxu0 0.0
      %782 = vmatprep.subr.mxu0 0.0
      %783 = vmatpush1.msra.mxu0 0.0
      %784 = vmatprep.subr.mxu0 0.0
      %785 = vmatpush1.msra.mxu0 0.0
      %786 = vmatprep.subr.mxu0 0.0
      %787 = vmatpush1.msra.mxu0 0.0
      %788 = vmatprep.subr.mxu0 0.0
      %789 = vmatpush1.msra.mxu0 0.0
      %790 = vmatprep.subr.mxu0 0.0
      %791 = vmatpush1.msra.mxu0 0.0
      %792 = vmatprep.subr.mxu0 0.0
      %793 = vmatpush1.msra.mxu0 0.0
      %794 = vmatprep.subr.mxu0 0.0
      %795 = vmatpush1.msra.mxu0 0.0
      %796 = vmatprep.subr.mxu0 0.0
      %797 = vmatpush1.msra.mxu0 0.0
      %798 = vmatprep.subr.mxu0 0.0
      %799 = vmatpush1.msra.mxu0 0.0
      %800 = vmatprep.subr.mxu0 0.0
      %801 = vmatpush1.msra.mxu0 0.0
      %802 = vmatprep.subr.mxu0 0.0
      %803 = vmatpush1.msra.mxu0 0.0
      %804 = vmatprep.subr.mxu0 0.0
      %805 = vmatpush1.msra.mxu0 0.0
      %806 = vmatprep.subr.mxu0 0.0
      %807 = vmatpush1.msra.mxu0 0.0
      %808 = vmatprep.mubr.f32.mxu0 0.0
      %809 = vmatmul.mubr.f32.gmra.mrb[0].mxu0 %v715
      %v810 = vpop.f32.mrb[0].mxu0
      %v811 = vadd.f32 %v712, %v810
      %v812 = vpop.f32.mrb[0].mxu0
      %813 = vmatprep.mubr.f32.mxu0 0.0
      %814 = vmatmul.mubr.f32.gmra.mrb[0].mxu0 %v718
      %v815 = vpop.f32.mrb[0].mxu0
      %v816 = vadd.f32 %v712, %v815
      %v817 = vpop.f32.mrb[0].mxu0
      %818 = vmatprep.mubr.f32.mxu0 0.0
      %819 = vmatmul.mubr.f32.gmra.mrb[0].mxu0 %v721
      %v820 = vpop.f32.mrb[0].mxu0
      %v821 = vadd.f32 %v712, %v820
      %v822 = vpop.f32.mrb[0].mxu0
      %823 = vmatprep.mubr.f32.mxu0 0.0
      %824 = vmatmul.mubr.f32.gmra.mrb[0].mxu0 %v724
      %v825 = vpop.f32.mrb[0].mxu0
      %v826 = vadd.f32 %v712, %v825
      %v827 = vpop.f32.mrb[0].mxu0
      %828 = vmatprep.mubr.f32.mxu0 0.0
      %829 = vmatmul.mubr.f32.gmra.mrb[0].mxu0 %v727
      %v830 = vpop.f32.mrb[0].mxu0
      %v831 = vadd.f32 %v712, %v830
      %v832 = vpop.f32.mrb[0].mxu0
      %833 = vmatprep.mubr.f32.mxu0 0.0
      %834 = vmatmul.mubr.f32.gmra.mrb[0].mxu0 %v730
      %v835 = vpop.f32.mrb[0].mxu0
      %v836 = vadd.f32 %v712, %v835
      %v837 = vpop.f32.mrb[0].mxu0
      %838 = vmatprep.mubr.f32.mxu0 0.0
      %839 = vmatmul.mubr.f32.gmra.mrb[0].mxu0 %v733
      %v840 = vpop.f32.mrb[0].mxu0
      %v841 = vadd.f32 %v712, %v840
      %v842 = vpop.f32.mrb[0].mxu0
      %843 = vmatprep.mubr.f32.mxu0 0.0
      %844 = vmatmul.mubr.f32.gmra.mrb[0].mxu0 %v736
      %v845 = vpop.f32.mrb[0].mxu0
      %v846 = vadd.f32 %v712, %v845
      %v847 = vpop.f32.mrb[0].mxu0
      %848 = vmatprep.mubr.f32.mxu0 0.0
      %849 = vmatmul.mubr.f32.gmra.mrb[0].mxu0 %v739
      %v850 = vpop.f32.mrb[0].mxu0
      %v851 = vadd.f32 %v712, %v850
      %v852 = vpop.f32.mrb[0].mxu0
      %853 = vmatprep.mubr.f32.mxu0 0.0
      %854 = vmatmul.mubr.f32.gmra.mrb[0].mxu0 %v742
      %v855 = vpop.f32.mrb[0].mxu0
      %v856 = vadd.f32 %v712, %v855
      %v857 = vpop.f32.mrb[0].mxu0
      %858 = vdwg.mxu0
      %859 = vst.msk [vmem:[%s492] sm:$0xff] %vm547, %v811
      %860 = vst.msk [vmem:[%s492 + $0x8] sm:$0xff] %vm547, %v816
      %861 = vst.msk [vmem:[%s492 + $0x10] sm:$0xff] %vm547, %v821
      %862 = vst.msk [vmem:[%s492 + $0x18] sm:$0xff] %vm547, %v826
      %863 = vst.msk [vmem:[%s492 + $0x20] sm:$0xff] %vm547, %v831
      %864 = vst.msk [vmem:[%s492 + $0x28] sm:$0xff] %vm547, %v836
      %865 = vst.msk [vmem:[%s492 + $0x30] sm:$0xff] %vm547, %v841
      %866 = vst.msk [vmem:[%s492 + $0x38] sm:$0xff] %vm547, %v846
      %867 = vst.msk [vmem:[%s492 + $0x40] sm:$0xff] %vm547, %v851
      %868 = vst.msk [vmem:[%s492 + $0x48] sm:$0xff] %vm547, %v856
      %v869 = vld [vmem:[%s6] sm:$0xff]
      %v870 = vld [vmem:[%s6 + $0x8] sm:$0xff]
      %v871 = vld [vmem:[%s6 + $0x10] sm:$0xff]
      %v872 = vld [vmem:[%s6 + $0x18] sm:$0xff]
      %v873 = vld [vmem:[%s7] sm:$0x1]
      %v875 = vlaneseq
      %v876 = vshrl.u32 %v875, 7
      %v877 = vsub.s32 0, %v876
      %v878 = vrot.slane %v873, %v877
      %880 = vmatprep.subr.mxu0 0.0
      %881 = vmatpush1.msra.mxu0 %v869
      %882 = vmatprep.subr.mxu0 0.0
      %883 = vmatpush1.msra.mxu0 %v870
      %884 = vmatprep.subr.mxu0 0.0
      %885 = vmatpush1.msra.mxu0 %v871
      %886 = vmatprep.subr.mxu0 0.0
      %887 = vmatpush1.msra.mxu0 %v872
      %888 = vmatprep.subr.mxu0 0.0
      %889 = vmatpush1.msra.mxu0 0.0
      %890 = vmatprep.subr.mxu0 0.0
      %891 = vmatpush1.msra.mxu0 0.0
      %892 = vmatprep.subr.mxu0 0.0
      %893 = vmatpush1.msra.mxu0 0.0
      %894 = vmatprep.subr.mxu0 0.0
      %895 = vmatpush1.msra.mxu0 0.0
      %896 = vmatprep.subr.mxu0 0.0
      %897 = vmatpush1.msra.mxu0 0.0
      %898 = vmatprep.subr.mxu0 0.0
      %899 = vmatpush1.msra.mxu0 0.0
      %900 = vmatprep.subr.mxu0 0.0
      %901 = vmatpush1.msra.mxu0 0.0
      %902 = vmatprep.subr.mxu0 0.0
      %903 = vmatpush1.msra.mxu0 0.0
      %904 = vmatprep.subr.mxu0 0.0
      %905 = vmatpush1.msra.mxu0 0.0
      %906 = vmatprep.subr.mxu0 0.0
      %907 = vmatpush1.msra.mxu0 0.0
      %908 = vmatprep.subr.mxu0 0.0
      %909 = vmatpush1.msra.mxu0 0.0
      %910 = vmatprep.subr.mxu0 0.0
      %911 = vmatpush1.msra.mxu0 0.0
      %912 = vmatprep.subr.mxu0 0.0
      %913 = vmatpush1.msra.mxu0 0.0
      %914 = vmatprep.subr.mxu0 0.0
      %915 = vmatpush1.msra.mxu0 0.0
      %916 = vmatprep.subr.mxu0 0.0
      %917 = vmatpush1.msra.mxu0 0.0
      %918 = vmatprep.subr.mxu0 0.0
      %919 = vmatpush1.msra.mxu0 0.0
      %920 = vmatprep.subr.mxu0 0.0
      %921 = vmatpush1.msra.mxu0 0.0
      %922 = vmatprep.subr.mxu0 0.0
      %923 = vmatpush1.msra.mxu0 0.0
      %924 = vmatprep.subr.mxu0 0.0
      %925 = vmatpush1.msra.mxu0 0.0
      %926 = vmatprep.subr.mxu0 0.0
      %927 = vmatpush1.msra.mxu0 0.0
      %928 = vmatprep.subr.mxu0 0.0
      %929 = vmatpush1.msra.mxu0 0.0
      %930 = vmatprep.subr.mxu0 0.0
      %931 = vmatpush1.msra.mxu0 0.0
      %932 = vmatprep.subr.mxu0 0.0
      %933 = vmatpush1.msra.mxu0 0.0
      %934 = vmatprep.subr.mxu0 0.0
      %935 = vmatpush1.msra.mxu0 0.0
      %936 = vmatprep.subr.mxu0 0.0
      %937 = vmatpush1.msra.mxu0 0.0
      %938 = vmatprep.subr.mxu0 0.0
      %939 = vmatpush1.msra.mxu0 0.0
      %940 = vmatprep.subr.mxu0 0.0
      %941 = vmatpush1.msra.mxu0 0.0
      %942 = vmatprep.subr.mxu0 0.0
      %943 = vmatpush1.msra.mxu0 0.0
      %944 = vmatprep.mubr.f32.mxu0 0.0
      %945 = vmatmul.mubr.f32.gmra.mrb[0].mxu0 %v715
      %v946 = vpop.f32.mrb[0].mxu0
      %v947 = vadd.f32 %v878, %v946
      %v948 = vpop.f32.mrb[0].mxu0
      %949 = vmatprep.mubr.f32.mxu0 0.0
      %950 = vmatmul.mubr.f32.gmra.mrb[0].mxu0 %v718
      %v951 = vpop.f32.mrb[0].mxu0
      %v952 = vadd.f32 %v878, %v951
      %v953 = vpop.f32.mrb[0].mxu0
      %954 = vmatprep.mubr.f32.mxu0 0.0
      %955 = vmatmul.mubr.f32.gmra.mrb[0].mxu0 %v721
      %v956 = vpop.f32.mrb[0].mxu0
      %v957 = vadd.f32 %v878, %v956
      %v958 = vpop.f32.mrb[0].mxu0
      %959 = vmatprep.mubr.f32.mxu0 0.0
      %960 = vmatmul.mubr.f32.gmra.mrb[0].mxu0 %v724
      %v961 = vpop.f32.mrb[0].mxu0
      %v962 = vadd.f32 %v878, %v961
      %v963 = vpop.f32.mrb[0].mxu0
      %964 = vmatprep.mubr.f32.mxu0 0.0
      %965 = vmatmul.mubr.f32.gmra.mrb[0].mxu0 %v727
      %v966 = vpop.f32.mrb[0].mxu0
      %v967 = vadd.f32 %v878, %v966
      %v968 = vpop.f32.mrb[0].mxu0
      %969 = vmatprep.mubr.f32.mxu0 0.0
      %970 = vmatmul.mubr.f32.gmra.mrb[0].mxu0 %v730
      %v971 = vpop.f32.mrb[0].mxu0
      %v972 = vadd.f32 %v878, %v971
      %v973 = vpop.f32.mrb[0].mxu0
      %974 = vmatprep.mubr.f32.mxu0 0.0
      %975 = vmatmul.mubr.f32.gmra.mrb[0].mxu0 %v733
      %v976 = vpop.f32.mrb[0].mxu0
      %v977 = vadd.f32 %v878, %v976
      %v978 = vpop.f32.mrb[0].mxu0
      %979 = vmatprep.mubr.f32.mxu0 0.0
      %980 = vmatmul.mubr.f32.gmra.mrb[0].mxu0 %v736
      %v981 = vpop.f32.mrb[0].mxu0
      %v982 = vadd.f32 %v878, %v981
      %v983 = vpop.f32.mrb[0].mxu0
      %984 = vmatprep.mubr.f32.mxu0 0.0
      %985 = vmatmul.mubr.f32.gmra.mrb[0].mxu0 %v739
      %v986 = vpop.f32.mrb[0].mxu0
      %v987 = vadd.f32 %v878, %v986
      %v988 = vpop.f32.mrb[0].mxu0
      %989 = vmatprep.mubr.f32.mxu0 0.0
      %990 = vmatmul.mubr.f32.gmra.mrb[0].mxu0 %v742
      %v991 = vpop.f32.mrb[0].mxu0
      %v992 = vadd.f32 %v878, %v991
      %v993 = vpop.f32.mrb[0].mxu0
      %994 = vdwg.mxu0
      %995 = vst.msk [vmem:[%s498] sm:$0xff] %vm547, %v947
      %996 = vst.msk [vmem:[%s498 + $0x8] sm:$0xff] %vm547, %v952
      %997 = vst.msk [vmem:[%s498 + $0x10] sm:$0xff] %vm547, %v957
      %998 = vst.msk [vmem:[%s498 + $0x18] sm:$0xff] %vm547, %v962
      %999 = vst.msk [vmem:[%s498 + $0x20] sm:$0xff] %vm547, %v967
      %1000 = vst.msk [vmem:[%s498 + $0x28] sm:$0xff] %vm547, %v972
      %1001 = vst.msk [vmem:[%s498 + $0x30] sm:$0xff] %vm547, %v977
      %1002 = vst.msk [vmem:[%s498 + $0x38] sm:$0xff] %vm547, %v982
      %1003 = vst.msk [vmem:[%s498 + $0x40] sm:$0xff] %vm547, %v987
      %1004 = vst.msk [vmem:[%s498 + $0x48] sm:$0xff] %vm547, %v992
      %v1005 = vld [vmem:[%s8] sm:$0xff]
      %v1006 = vld [vmem:[%s8 + $0x8] sm:$0xff]
      %v1007 = vld [vmem:[%s8 + $0x10] sm:$0xff]
      %v1008 = vld [vmem:[%s8 + $0x18] sm:$0xff]
      %v1009 = vld [vmem:[%s9] sm:$0x1]
      %v1011 = vlaneseq
      %v1012 = vshrl.u32 %v1011, 7
      %v1013 = vsub.s32 0, %v1012
      %v1014 = vrot.slane %v1009, %v1013
      %1016 = vmatprep.subr.mxu0 0.0
      %1017 = vmatpush1.msra.mxu0 %v1005
      %1018 = vmatprep.subr.mxu0 0.0
      %1019 = vmatpush1.msra.mxu0 %v1006
      %1020 = vmatprep.subr.mxu0 0.0
      %1021 = vmatpush1.msra.mxu0 %v1007
      %1022 = vmatprep.subr.mxu0 0.0
      %1023 = vmatpush1.msra.mxu0 %v1008
      %1024 = vmatprep.subr.mxu0 0.0
      %1025 = vmatpush1.msra.mxu0 0.0
      %1026 = vmatprep.subr.mxu0 0.0
      %1027 = vmatpush1.msra.mxu0 0.0
      %1028 = vmatprep.subr.mxu0 0.0
      %1029 = vmatpush1.msra.mxu0 0.0
      %1030 = vmatprep.subr.mxu0 0.0
      %1031 = vmatpush1.msra.mxu0 0.0
      %1032 = vmatprep.subr.mxu0 0.0
      %1033 = vmatpush1.msra.mxu0 0.0
      %1034 = vmatprep.subr.mxu0 0.0
      %1035 = vmatpush1.msra.mxu0 0.0
      %1036 = vmatprep.subr.mxu0 0.0
      %1037 = vmatpush1.msra.mxu0 0.0
      %1038 = vmatprep.subr.mxu0 0.0
      %1039 = vmatpush1.msra.mxu0 0.0
      %1040 = vmatprep.subr.mxu0 0.0
      %1041 = vmatpush1.msra.mxu0 0.0
      %1042 = vmatprep.subr.mxu0 0.0
      %1043 = vmatpush1.msra.mxu0 0.0
      %1044 = vmatprep.subr.mxu0 0.0
      %1045 = vmatpush1.msra.mxu0 0.0
      %1046 = vmatprep.subr.mxu0 0.0
      %1047 = vmatpush1.msra.mxu0 0.0
      %1048 = vmatprep.subr.mxu0 0.0
      %1049 = vmatpush1.msra.mxu0 0.0
      %1050 = vmatprep.subr.mxu0 0.0
      %1051 = vmatpush1.msra.mxu0 0.0
      %1052 = vmatprep.subr.mxu0 0.0
      %1053 = vmatpush1.msra.mxu0 0.0
      %1054 = vmatprep.subr.mxu0 0.0
      %1055 = vmatpush1.msra.mxu0 0.0
      %1056 = vmatprep.subr.mxu0 0.0
      %1057 = vmatpush1.msra.mxu0 0.0
      %1058 = vmatprep.subr.mxu0 0.0
      %1059 = vmatpush1.msra.mxu0 0.0
      %1060 = vmatprep.subr.mxu0 0.0
      %1061 = vmatpush1.msra.mxu0 0.0
      %1062 = vmatprep.subr.mxu0 0.0
      %1063 = vmatpush1.msra.mxu0 0.0
      %1064 = vmatprep.subr.mxu0 0.0
      %1065 = vmatpush1.msra.mxu0 0.0
      %1066 = vmatprep.subr.mxu0 0.0
      %1067 = vmatpush1.msra.mxu0 0.0
      %1068 = vmatprep.subr.mxu0 0.0
      %1069 = vmatpush1.msra.mxu0 0.0
      %1070 = vmatprep.subr.mxu0 0.0
      %1071 = vmatpush1.msra.mxu0 0.0
      %1072 = vmatprep.subr.mxu0 0.0
      %1073 = vmatpush1.msra.mxu0 0.0
      %1074 = vmatprep.subr.mxu0 0.0
      %1075 = vmatpush1.msra.mxu0 0.0
      %1076 = vmatprep.subr.mxu0 0.0
      %1077 = vmatpush1.msra.mxu0 0.0
      %1078 = vmatprep.subr.mxu0 0.0
      %1079 = vmatpush1.msra.mxu0 0.0
      %1080 = vmatprep.mubr.f32.mxu0 0.0
      %1081 = vmatmul.mubr.f32.gmra.mrb[0].mxu0 %v715
      %v1082 = vpop.f32.mrb[0].mxu0
      %v1083 = vadd.f32 %v1014, %v1082
      %v1084 = vpop.f32.mrb[0].mxu0
      %1085 = vmatprep.mubr.f32.mxu0 0.0
      %1086 = vmatmul.mubr.f32.gmra.mrb[0].mxu0 %v718
      %v1087 = vpop.f32.mrb[0].mxu0
      %v1088 = vadd.f32 %v1014, %v1087
      %v1089 = vpop.f32.mrb[0].mxu0
      %1090 = vmatprep.mubr.f32.mxu0 0.0
      %1091 = vmatmul.mubr.f32.gmra.mrb[0].mxu0 %v721
      %v1092 = vpop.f32.mrb[0].mxu0
      %v1093 = vadd.f32 %v1014, %v1092
      %v1094 = vpop.f32.mrb[0].mxu0
      %1095 = vmatprep.mubr.f32.mxu0 0.0
      %1096 = vmatmul.mubr.f32.gmra.mrb[0].mxu0 %v724
      %v1097 = vpop.f32.mrb[0].mxu0
      %v1098 = vadd.f32 %v1014, %v1097
      %v1099 = vpop.f32.mrb[0].mxu0
      %1100 = vmatprep.mubr.f32.mxu0 0.0
      %1101 = vmatmul.mubr.f32.gmra.mrb[0].mxu0 %v727
      %v1102 = vpop.f32.mrb[0].mxu0
      %v1103 = vadd.f32 %v1014, %v1102
      %v1104 = vpop.f32.mrb[0].mxu0
      %1105 = vmatprep.mubr.f32.mxu0 0.0
      %1106 = vmatmul.mubr.f32.gmra.mrb[0].mxu0 %v730
      %v1107 = vpop.f32.mrb[0].mxu0
      %v1108 = vadd.f32 %v1014, %v1107
      %v1109 = vpop.f32.mrb[0].mxu0
      %1110 = vmatprep.mubr.f32.mxu0 0.0
      %1111 = vmatmul.mubr.f32.gmra.mrb[0].mxu0 %v733
      %v1112 = vpop.f32.mrb[0].mxu0
      %v1113 = vadd.f32 %v1014, %v1112
      %v1114 = vpop.f32.mrb[0].mxu0
      %1115 = vmatprep.mubr.f32.mxu0 0.0
      %1116 = vmatmul.mubr.f32.gmra.mrb[0].mxu0 %v736
      %v1117 = vpop.f32.mrb[0].mxu0
      %v1118 = vadd.f32 %v1014, %v1117
      %v1119 = vpop.f32.mrb[0].mxu0
      %1120 = vmatprep.mubr.f32.mxu0 0.0
      %1121 = vmatmul.mubr.f32.gmra.mrb[0].mxu0 %v739
      %v1122 = vpop.f32.mrb[0].mxu0
      %v1123 = vadd.f32 %v1014, %v1122
      %v1124 = vpop.f32.mrb[0].mxu0
      %1125 = vmatprep.mubr.f32.mxu0 0.0
      %1126 = vmatmul.mubr.f32.gmra.mrb[0].mxu0 %v742
      %v1127 = vpop.f32.mrb[0].mxu0
      %v1128 = vadd.f32 %v1014, %v1127
      %v1129 = vpop.f32.mrb[0].mxu0
      %1130 = vdwg.mxu0
      %1131 = vst.msk [vmem:[%s504] sm:$0xff] %vm547, %v1083
      %1132 = vst.msk [vmem:[%s504 + $0x8] sm:$0xff] %vm547, %v1088
      %1133 = vst.msk [vmem:[%s504 + $0x10] sm:$0xff] %vm547, %v1093
      %1134 = vst.msk [vmem:[%s504 + $0x18] sm:$0xff] %vm547, %v1098
      %1135 = vst.msk [vmem:[%s504 + $0x20] sm:$0xff] %vm547, %v1103
      %1136 = vst.msk [vmem:[%s504 + $0x28] sm:$0xff] %vm547, %v1108
      %1137 = vst.msk [vmem:[%s504 + $0x30] sm:$0xff] %vm547, %v1113
      %1138 = vst.msk [vmem:[%s504 + $0x38] sm:$0xff] %vm547, %v1118
      %1139 = vst.msk [vmem:[%s504 + $0x40] sm:$0xff] %vm547, %v1123
      %1140 = vst.msk [vmem:[%s504 + $0x48] sm:$0xff] %vm547, %v1128
      %s1141 = smul.u32 10, %s25
      %p1142 = scmp.lt.s32.totalorder %s1141, 19
      %s1143 = scalar_select %p1142, %s1141, 19
      %s1144 = smul.addr %s1143, 8
      %s1145 = scalar_lea.vmem %s10, %s1144
      %s1146 = smul.u32 10, %s25
      %p1147 = scmp.lt.s32.totalorder %s1146, 19
      %s1148 = scalar_select %p1147, %s1146, 19
      %s1149 = smul.addr %s1148, 8
      %s1150 = scalar_lea.vmem %s11, %s1149
      %s1151 = smul.u32 10, %s25
      %p1152 = scmp.lt.s32.totalorder %s1151, 19
      %s1153 = scalar_select %p1152, %s1151, 19
      %s1154 = smul.addr %s1153, 8
      %s1155 = scalar_lea.vmem %s12, %s1154
      %s1156 = smul.u32 10, %s25
      %p1157 = scmp.lt.s32.totalorder %s1156, 19
      %s1158 = scalar_select %p1157, %s1156, 19
      %s1159 = smul.addr %s1158, 8
      %s1160 = scalar_lea.vmem %s13, %s1159
      // Predicated region
      $region61: #{tpu_custom_call.1} parent=59 // pred_check
        %p1161 = pneg %p263
      $region62: #{tpu_custom_call.1} parent=59 // pred_check_branch
        %1163 = sbr.rel (%p1161) target = $region64
      $region63: #{tpu_custom_call.1} parent=59 // pred_region
        %s1164 = smul.u32 10, %s25
      $region64: #{tpu_custom_call.1} parent=59 // pred_fallthru
        _
      // Predicated region
      $region65: #{tpu_custom_call.1} parent=59 // pred_check
        %p1165 = pneg %p289
      $region66: #{tpu_custom_call.1} parent=59 // pred_check_branch
        %1167 = sbr.rel (%p1165) target = $region68
      $region67: #{tpu_custom_call.1} parent=59 // pred_region
        %s1168 = smul.u32 10, %s25
      $region68: #{tpu_custom_call.1} parent=59 // pred_fallthru
        _
      // Predicated region
      $region69: #{tpu_custom_call.1} parent=59 // pred_check
        %p1169 = pneg %p315
      $region70: #{tpu_custom_call.1} parent=59 // pred_check_branch
        %1171 = sbr.rel (%p1169) target = $region72
      $region71: #{tpu_custom_call.1} parent=59 // pred_region
        %s1172 = smul.u32 10, %s25
      $region72: #{tpu_custom_call.1} parent=59 // pred_fallthru
        _
      // Predicated region
      $region73: #{tpu_custom_call.1} parent=59 // pred_check
        %p1173 = pneg %p341
      $region74: #{tpu_custom_call.1} parent=59 // pred_check_branch
        %1175 = sbr.rel (%p1173) target = $region76
      $region75: #{tpu_custom_call.1} parent=59 // pred_region
        %s1176 = smul.u32 10, %s25
      $region76: #{tpu_custom_call.1} parent=59 // pred_fallthru
        _
    $region60: #{tpu_custom_call.1} parent=5 // pred_fallthru
      _
    %p1177 = scmp.le.s32.totalorder 2, %s20
    // Predicated region
    $region77: #{tpu_custom_call.1} parent=5 // pred_check
      %p1178 = pneg %p1177
    $region78: #{tpu_custom_call.1} parent=5 // pred_check_branch
      %1180 = sbr.rel (%p1178) target = $region80
    $region79: #{tpu_custom_call.1} parent=5 // pred_region
      %s1181 = ssub.s32 %s20, 2
      // Predicated region
      $region81: #{tpu_custom_call.1} parent=79 // pred_check
        %p1182 = pneg %p269
      $region82: #{tpu_custom_call.1} parent=79 // pred_check_branch
        %1184 = sbr.rel (%p1182) target = $region84
      $region83: #{tpu_custom_call.1} parent=79 // pred_region
        %s1185 = smul.u32 10, %s26
        %p1186 = scmp.lt.s32.totalorder %s1185, 19
        %s1187 = scalar_select %p1186, %s1185, 19
        %s1188 = smul.addr %s1187, 8
        %s1189 = scalar_lea.vmem %s10, %s1188
      $region84: #{tpu_custom_call.1} parent=79 // pred_fallthru
        _
      // Predicated region
      $region85: #{tpu_custom_call.1} parent=79 // pred_check
        %p1190 = pneg %p295
      $region86: #{tpu_custom_call.1} parent=79 // pred_check_branch
        %1192 = sbr.rel (%p1190) target = $region88
      $region87: #{tpu_custom_call.1} parent=79 // pred_region
        %s1193 = smul.u32 10, %s26
        %p1194 = scmp.lt.s32.totalorder %s1193, 19
        %s1195 = scalar_select %p1194, %s1193, 19
        %s1196 = smul.addr %s1195, 8
        %s1197 = scalar_lea.vmem %s11, %s1196
      $region88: #{tpu_custom_call.1} parent=79 // pred_fallthru
        _
      // Predicated region
      $region89: #{tpu_custom_call.1} parent=79 // pred_check
        %p1198 = pneg %p321
      $region90: #{tpu_custom_call.1} parent=79 // pred_check_branch
        %1200 = sbr.rel (%p1198) target = $region92
      $region91: #{tpu_custom_call.1} parent=79 // pred_region
        %s1201 = smul.u32 10, %s26
        %p1202 = scmp.lt.s32.totalorder %s1201, 19
        %s1203 = scalar_select %p1202, %s1201, 19
        %s1204 = smul.addr %s1203, 8
        %s1205 = scalar_lea.vmem %s12, %s1204
      $region92: #{tpu_custom_call.1} parent=79 // pred_fallthru
        _
      // Predicated region
      $region93: #{tpu_custom_call.1} parent=79 // pred_check
        %p1206 = pneg %p347
      $region94: #{tpu_custom_call.1} parent=79 // pred_check_branch
        %1208 = sbr.rel (%p1206) target = $region96
      $region95: #{tpu_custom_call.1} parent=79 // pred_region
        %s1209 = smul.u32 10, %s26
        %p1210 = scmp.lt.s32.totalorder %s1209, 19
        %s1211 = scalar_select %p1210, %s1209, 19
        %s1212 = smul.addr %s1211, 8
        %s1213 = scalar_lea.vmem %s13, %s1212
      $region96: #{tpu_custom_call.1} parent=79 // pred_fallthru
        _
    $region80: #{tpu_custom_call.1} parent=5 // pred_fallthru
      _
  $region6: #{tpu_custom_call.1} parent=0 // loop_footer
    %s24 = sadd.s32 1, %s20
  $region7: #{tpu_custom_call.1} parent=0 // loop_footer_branch
    %19 = sbr.rel target = $region3
  $region8: #{tpu_custom_call.1} parent=0 // loop_exit
    _

</llo_original>
